<compile_context>
chip_gen: v7x
topology: tpu7x:2x2x1
jax: 0.10.0
libtpu: 0.0.40
codegen_flags: <defaults>
</compile_context>

<pallas_src>
import jax
import jax.numpy as jnp
from jax import lax
from jax.experimental import pallas as pl
from jax.experimental.pallas import tpu as pltpu


def _round_up(x, m):
    return ((x + m - 1) // m) * m


def _gelu_exact_f32(x):
    # F.gelu default: x * 0.5 * (1 + erf(x / sqrt(2))), computed in f32.
    return x * 0.5 * (1.0 + lax.erf(x * 0.7071067811865476))


def ffn_kernel(x_ref, w1_ref, b1_ref, w2_ref, b2_ref, o_ref, acc_ref):
    # grid = (rows, d_ff blocks); k is the d_ff (reduction-style) axis.
    # x_ref:  (tm, d_model)      bf16   — same block for every k (stays resident)
    # w1_ref: (d_model, tn_ff)   bf16
    # b1_ref: (1, tn_ff)         f32
    # w2_ref: (tn_ff, d_model)   bf16
    # b2_ref: (1, d_model)       f32
    # o_ref:  (tm, d_model)      out dtype
    # acc_ref:(tm, d_model)      f32 scratch accumulator
    k = pl.program_id(1)

    @pl.when(k == 0)
    def _():
        acc_ref[...] = jnp.zeros_like(acc_ref)

    # fc1 block: (tm, d_model) @ (d_model, tn_ff) -> f32, fuse bias + GELU.
    h = jnp.dot(x_ref[...], w1_ref[...], preferred_element_type=jnp.float32)
    h = _gelu_exact_f32(h + b1_ref[...])

    # fc2 partial: (tm, tn_ff) @ (tn_ff, d_model), accumulate in f32.
    acc_ref[...] += jnp.dot(h.astype(w2_ref.dtype), w2_ref[...],
                            preferred_element_type=jnp.float32)

    @pl.when(k == pl.num_programs(1) - 1)
    def _():
        o_ref[...] = (acc_ref[...] + b2_ref[...]).astype(o_ref.dtype)


def poswise_ffn(x, w1, b1, w2, b2, *, tm=256, tn_ff=512,
                compute_dtype=jnp.bfloat16):
    """x: (B, S, d_model) -> (B, S, d_model).  w1:(d_model,d_ff), w2:(d_ff,d_model)."""
    B, S, d_model = x.shape
    d_ff = w1.shape[1]
    out_dtype = x.dtype
    M = B * S

    # Row tile: clamp for tiny M (keep sublane alignment of 8), pad rows if needed.
    tm = min(tm, _round_up(M, 8))
    M_pad = _round_up(M, tm)

    # d_ff blocking: fall back to a single block if tn_ff doesn't divide d_ff.
    if d_ff % tn_ff != 0:
        tn_ff = d_ff
    n_k = d_ff // tn_ff

    x2d = x.reshape(M, d_model).astype(compute_dtype)
    if M_pad != M:
        x2d = jnp.pad(x2d, ((0, M_pad - M), (0, 0)))
    w1c = w1.astype(compute_dtype)
    w2c = w2.astype(compute_dtype)
    b1c = b1.reshape(1, d_ff).astype(jnp.float32)
    b2c = b2.reshape(1, d_model).astype(jnp.float32)

    out_itemsize = jnp.dtype(out_dtype).itemsize
    cost = pl.CostEstimate(
        flops=4 * M_pad * d_model * d_ff,        # two matmuls, 2*M*K*N each
        transcendentals=M_pad * d_ff,            # erf in GELU
        bytes_accessed=(x2d.size * x2d.dtype.itemsize
                        + w1c.size * w1c.dtype.itemsize
                        + w2c.size * w2c.dtype.itemsize
                        + b1c.size * 4 + b2c.size * 4
                        + M_pad * d_model * out_itemsize),
    )

    out2d = pl.pallas_call(
        ffn_kernel,
        out_shape=jax.ShapeDtypeStruct((M_pad, d_model), out_dtype),
        grid_spec=pltpu.PrefetchScalarGridSpec(
            num_scalar_prefetch=0,
            grid=(M_pad // tm, n_k),
            in_specs=[
                pl.BlockSpec((tm, d_model), lambda i, k: (i, 0)),      # x rows
                pl.BlockSpec((d_model, tn_ff), lambda i, k: (0, k)),   # w1 block
                pl.BlockSpec((1, tn_ff), lambda i, k: (0, k)),         # b1 block
                pl.BlockSpec((tn_ff, d_model), lambda i, k: (k, 0)),   # w2 block
                pl.BlockSpec((1, d_model), lambda i, k: (0, 0)),       # b2
            ],
            out_specs=pl.BlockSpec((tm, d_model), lambda i, k: (i, 0)),
            scratch_shapes=[pltpu.VMEM((tm, d_model), jnp.float32)],
        ),
        compiler_params=pltpu.CompilerParams(
            dimension_semantics=("parallel", "arbitrary"),
            vmem_limit_bytes=48 * 1024 * 1024,
        ),
        cost_estimate=cost,
    )(x2d, w1c, b1c, w2c, b2c)

    return out2d[:M].reshape(B, S, d_model)


def init_params(key, d_model, d_ff, dtype=jnp.float32):
    # Deterministic synthetic init mimicking nn.Linear's uniform(-1/sqrt(fan_in), +...)
    k1, k2, k3, k4 = jax.random.split(key, 4)
    bound1 = 1.0 / jnp.sqrt(d_model)
    bound2 = 1.0 / jnp.sqrt(d_ff)
    w1 = jax.random.uniform(k1, (d_model, d_ff), dtype, -bound1, bound1)
    b1 = jax.random.uniform(k2, (1, d_ff), dtype, -bound1, bound1)
    w2 = jax.random.uniform(k3, (d_ff, d_model), dtype, -bound2, bound2)
    b2 = jax.random.uniform(k4, (1, d_model), dtype, -bound2, bound2)
    return w1, b1, w2, b2


if __name__ == "__main__":
    # Small shapes consistent with the module (d_model=768, d_ff=4*d_model).
    D_MODEL = 768
    D_FF = 4 * D_MODEL
    B, S = 2, 8

    key = jax.random.PRNGKey(0)
    kx, kp = jax.random.split(key)
    x = jax.random.normal(kx, (B, S, D_MODEL), jnp.float32)
    w1, b1, w2, b2 = init_params(kp, D_MODEL, D_FF)

    out = poswise_ffn(x, w1, b1, w2, b2)
    out = jax.block_until_ready(out)

    # f32 reference with exact-erf GELU (matches F.gelu default).
    h_ref = x.reshape(-1, D_MODEL) @ w1 + b1
    h_ref = h_ref * 0.5 * (1.0 + lax.erf(h_ref / jnp.sqrt(2.0)))
    ref = (h_ref @ w2 + b2).reshape(B, S, D_MODEL)

    # Kernel uses bf16 matmul inputs with f32 accumulation -> loose tolerance.
    assert jnp.allclose(out, ref, atol=3e-2, rtol=3e-2), "mismatch vs reference"

    print("KERNEL_OK")
</pallas_src>

<mosaic_0001>
module attributes {stable_mosaic.version = 11 : i64} {
  func.func @ffn_kernel(%arg0: i32, %arg1: i32, %arg2: memref<16x768xbf16, #tpu.memory_space<vmem>>, %arg3: memref<768x512xbf16, #tpu.memory_space<vmem>>, %arg4: memref<1x512xf32, #tpu.memory_space<vmem>>, %arg5: memref<512x768xbf16, #tpu.memory_space<vmem>>, %arg6: memref<1x768xf32, #tpu.memory_space<vmem>>, %arg7: memref<16x768xf32, #tpu.memory_space<vmem>>, %arg8: memref<16x768xf32, #tpu.memory_space<vmem>>) attributes {dimension_semantics = [#tpu.dimension_semantics<parallel>, #tpu.dimension_semantics<arbitrary>], iteration_bounds = array<i64: 1, 6>, scalar_prefetch = 0 : i64, scratch_operands = 1 : i64, tpu.core_type = #tpu.core_type<tc>, window_params = [{transform_indices = @transform_0, window_bounds = array<i64: 16, 768>}, {transform_indices = @transform_1, window_bounds = array<i64: 768, 512>}, {transform_indices = @transform_2, window_bounds = array<i64: 1, 512>}, {transform_indices = @transform_3, window_bounds = array<i64: 512, 768>}, {pipeline_mode = #tpu.pipeline_mode<synchronous>, transform_indices = @transform_4, window_bounds = array<i64: 1, 768>}, {transform_indices = @transform_5, window_bounds = array<i64: 16, 768>}]} {
    %c0_i32 = arith.constant 0 : i32
    %0 = arith.cmpi eq, %arg1, %c0_i32 : i32
    %1 = arith.extui %0 : i1 to i32
    %c0_i32_0 = arith.constant 0 : i32
    %2 = arith.cmpi ne, %1, %c0_i32_0 : i32
    scf.if %2 {
      %cst_17 = arith.constant 0.000000e+00 : f32
      %26 = vector.broadcast %cst_17 : f32 to vector<16x768xf32>
      %c0_18 = arith.constant 0 : index
      %c0_19 = arith.constant 0 : index
      %27 = vector.load %arg8[%c0_18, %c0_19] : memref<16x768xf32, #tpu.memory_space<vmem>>, vector<16x768xf32>
      tpu.vector_store %arg8[%c0_18, %c0_19], %26 {strides = array<i32>} : memref<16x768xf32, #tpu.memory_space<vmem>>, vector<16x768xf32>,
    } else {
    }
    %c0 = arith.constant 0 : index
    %c0_1 = arith.constant 0 : index
    %3 = vector.load %arg2[%c0, %c0_1] : memref<16x768xbf16, #tpu.memory_space<vmem>>, vector<16x768xbf16>
    %c0_2 = arith.constant 0 : index
    %c0_3 = arith.constant 0 : index
    %4 = vector.load %arg3[%c0_2, %c0_3] : memref<768x512xbf16, #tpu.memory_space<vmem>>, vector<768x512xbf16>
    %cst = arith.constant dense<0.000000e+00> : vector<16x512xf32>
    %5 = tpu.matmul %3, %4, %cst {dimension_numbers = #tpu.dot_dimension_numbers<[1], [0], [0], [1], [0, 0, 1, 1], [], []>} : vector<16x768xbf16>, vector<768x512xbf16>, vector<16x512xf32> -> vector<16x512xf32>
    %c0_4 = arith.constant 0 : index
    %c0_5 = arith.constant 0 : index
    %6 = vector.load %arg4[%c0_4, %c0_5] : memref<1x512xf32, #tpu.memory_space<vmem>>, vector<1x512xf32>
    %7 = vector.broadcast %6 : vector<1x512xf32> to vector<16x512xf32>
    %8 = arith.addf %5, %7 : vector<16x512xf32>
    %cst_6 = arith.constant 5.000000e-01 : f32
    %9 = vector.broadcast %cst_6 : f32 to vector<16x512xf32>
    %10 = arith.mulf %8, %9 : vector<16x512xf32>
    %cst_7 = arith.constant 0.707106769 : f32
    %11 = vector.broadcast %cst_7 : f32 to vector<16x512xf32>
    %12 = arith.mulf %8, %11 : vector<16x512xf32>
    %13 = math.erf %12 : vector<16x512xf32>
    %cst_8 = arith.constant 1.000000e+00 : f32
    %14 = vector.broadcast %cst_8 : f32 to vector<16x512xf32>
    %15 = arith.addf %14, %13 : vector<16x512xf32>
    %16 = arith.mulf %10, %15 : vector<16x512xf32>
    %c0_9 = arith.constant 0 : index
    %c0_10 = arith.constant 0 : index
    %17 = vector.load %arg8[%c0_9, %c0_10] : memref<16x768xf32, #tpu.memory_space<vmem>>, vector<16x768xf32>
    %18 = arith.truncf %16 : vector<16x512xf32> to vector<16x512xbf16>
    %c0_11 = arith.constant 0 : index
    %c0_12 = arith.constant 0 : index
    %19 = vector.load %arg5[%c0_11, %c0_12] : memref<512x768xbf16, #tpu.memory_space<vmem>>, vector<512x768xbf16>
    %cst_13 = arith.constant dense<0.000000e+00> : vector<16x768xf32>
    %20 = tpu.matmul %18, %19, %cst_13 {dimension_numbers = #tpu.dot_dimension_numbers<[1], [0], [0], [1], [0, 0, 1, 1], [], []>} : vector<16x512xbf16>, vector<512x768xbf16>, vector<16x768xf32> -> vector<16x768xf32>
    %21 = arith.addf %17, %20 : vector<16x768xf32>
    %c0_14 = arith.constant 0 : index
    %c0_15 = arith.constant 0 : index
    %22 = vector.load %arg8[%c0_14, %c0_15] : memref<16x768xf32, #tpu.memory_space<vmem>>, vector<16x768xf32>
    tpu.vector_store %arg8[%c0_14, %c0_15], %21 {strides = array<i32>} : memref<16x768xf32, #tpu.memory_space<vmem>>, vector<16x768xf32>,
    %c5_i32 = arith.constant 5 : i32
    %23 = arith.cmpi eq, %arg1, %c5_i32 : i32
    %24 = arith.extui %23 : i1 to i32
    %c0_i32_16 = arith.constant 0 : i32
    %25 = arith.cmpi ne, %24, %c0_i32_16 : i32
    scf.if %25 {
      %c0_17 = arith.constant 0 : index
      %c0_18 = arith.constant 0 : index
      %26 = vector.load %arg8[%c0_17, %c0_18] : memref<16x768xf32, #tpu.memory_space<vmem>>, vector<16x768xf32>
      %c0_19 = arith.constant 0 : index
      %c0_20 = arith.constant 0 : index
      %27 = vector.load %arg6[%c0_19, %c0_20] : memref<1x768xf32, #tpu.memory_space<vmem>>, vector<1x768xf32>
      %28 = vector.broadcast %27 : vector<1x768xf32> to vector<16x768xf32>
      %29 = arith.addf %26, %28 : vector<16x768xf32>
      %c0_21 = arith.constant 0 : index
      %c0_22 = arith.constant 0 : index
      %30 = vector.load %arg7[%c0_21, %c0_22] : memref<16x768xf32, #tpu.memory_space<vmem>>, vector<16x768xf32>
      tpu.vector_store %arg7[%c0_21, %c0_22], %29 {strides = array<i32>} : memref<16x768xf32, #tpu.memory_space<vmem>>, vector<16x768xf32>,
    } else {
    }
    return
  }
  func.func @transform_0(%arg0: i32, %arg1: i32) -> (i32, i32) {
    %c0_i32 = arith.constant 0 : i32
    %c0_i32_0 = arith.constant 0 : i32
    return %arg0, %c0_i32 : i32, i32
  }
  func.func @transform_1(%arg0: i32, %arg1: i32) -> (i32, i32) {
    %c0_i32 = arith.constant 0 : i32
    %c0_i32_0 = arith.constant 0 : i32
    return %c0_i32, %arg1 : i32, i32
  }
  func.func @transform_2(%arg0: i32, %arg1: i32) -> (i32, i32) {
    %c0_i32 = arith.constant 0 : i32
    %c0_i32_0 = arith.constant 0 : i32
    return %c0_i32, %arg1 : i32, i32
  }
  func.func @transform_3(%arg0: i32, %arg1: i32) -> (i32, i32) {
    %c0_i32 = arith.constant 0 : i32
    %c0_i32_0 = arith.constant 0 : i32
    return %arg1, %c0_i32 : i32, i32
  }
  func.func @transform_4(%arg0: i32, %arg1: i32) -> (i32, i32) {
    %c0_i32 = arith.constant 0 : i32
    %c0_i32_0 = arith.constant 0 : i32
    %c0_i32_1 = arith.constant 0 : i32
    return %c0_i32, %c0_i32_0 : i32, i32
  }
  func.func @transform_5(%arg0: i32, %arg1: i32) -> (i32, i32) {
    %c0_i32 = arith.constant 0 : i32
    %c0_i32_0 = arith.constant 0 : i32
    return %arg0, %c0_i32 : i32, i32
  }
}

</mosaic_0001>

<llo_original>
// kernel: tpu_custom_call.1
$region0: #{tpu_custom_call.1}
  #allocation0 [shape = 'u32[]', space=smem, size = 0x4, offset = 0x4, fixed_abs, tag = 'smem constant byte address 0x4 - core index']
  #allocation1 [shape = 'u32[144,128]{1,0:T(1,128)}', space=vmem, size = 0x12000, scoped, tag = 'internal scratch']
  #allocation2 [shape = 'f32[16,768]{1,0:T(8,128)}', space=vmem, size = 0xc000, scoped, tag = 'scratch operand']
  %s0 = inlined_call_operand.hbm [shape: bf16[16,768], index: 0, kind: input, shape index: {}]
  %s1 = inlined_call_operand.hbm [shape: bf16[768,3072], index: 1, kind: input, shape index: {}]
  %s2 = inlined_call_operand.hbm [shape: f32[1,3072], index: 2, kind: input, shape index: {}]
  %s3 = inlined_call_operand.hbm [shape: bf16[3072,768], index: 3, kind: input, shape index: {}]
  %s4 = inlined_call_operand.hbm [shape: f32[1,768], index: 4, kind: input, shape index: {}]
  %s5 = inlined_call_operand.hbm [shape: f32[16,768], index: 5, kind: output, shape index: {}]
  %s6 = sld [smem:[#allocation0]]
  $region81: #{tpu_custom_call.1} parent=0
    _
  %s8 = ssub.s32 1, %s6
  %s9 = scalar_select 0, %s8, %s6
  $region1: #{tpu_custom_call.1} parent=0
    #allocation3 [shape = 'u8[24576]{0}', space=vmem, size = 0x6000, scoped, tag = 'input window, operand 0, single buffered']
    #allocation4 [shape = 's32[2]{0}', space=sflag, size = 0x8, scoped, tag = 'scoped memory for tpu_custom_call.1']
    #allocation5 [shape = 's32[2]{0}', space=sflag, size = 0x8, scoped, tag = 'scoped memory for tpu_custom_call.1']
    #allocation6 [shape = 'u8[1572864]{0}', space=vmem, size = 0x180000, scoped, tag = 'input window, operand 1']
    #allocation7 [shape = 's32[2]{0}', space=sflag, size = 0x8, scoped, tag = 'scoped memory for tpu_custom_call.1']
    #allocation8 [shape = 'u8[4096]{0}', space=vmem, size = 0x1000, scoped, tag = 'input window, operand 2']
    #allocation9 [shape = 'u8[1572864]{0}', space=vmem, size = 0x180000, scoped, tag = 'input window, operand 3']
    #allocation10 [shape = 's32[2]{0}', space=sflag, size = 0x8, scoped, tag = 'scoped memory for tpu_custom_call.1']
    #allocation11 [shape = 'u8[3072]{0}', space=vmem, size = 0xc00, scoped, tag = 'input window, operand 4, single buffered']
    #allocation12 [shape = 'u8[49152]{0}', space=vmem, size = 0xc000, scoped, tag = 'output window, operand 0, single buffered']
    %10 = vsyncpa [#allocation4], 0
    %11 = vsyncpa [#allocation7], 0
    %s12 = scalar_lea.sflag [#allocation7], 1
    %13 = vsyncpa %s12, 0
    %14 = vsyncpa [#allocation10], 0
    %s15 = scalar_lea.sflag [#allocation10], 1
    %16 = vsyncpa %s15, 0
    %17 = vsyncpa [#allocation5], 0
    loop: start=0, step=1, limit=8
    $region2: #{tpu_custom_call.1} parent=1 // loop_pre_header
      _
    $region3: #{tpu_custom_call.1} parent=1 // loop_header
      %s19 = sphi 0, %s23
      %p20 = scmp.ge.s32.totalorder %s19, 8
      %s26 = sphi 0, %s38
      %s27 = sphi 0, %s34
      %s28 = sphi 0, %s26
      %s29 = sphi 0, %s27
      %s30 = sphi 0, %s28
      %s31 = sphi 0, %s29
      %s41 = sphi 0, %s43
      %s44 = sphi 0, %s41
      %s45 = sphi 0, %s44
      %s61 = sphi 0, %s45
      %s67 = sphi 0, %s69
      %s70 = sphi 0, %s67
      %s71 = sphi 0, %s70
      %s87 = sphi 0, %s71
      %s93 = sphi 0, %s95
      %s96 = sphi 0, %s93
      %s97 = sphi 0, %s96
      %s113 = sphi 0, %s97
      %s119 = sphi 0, %s121
      %s122 = sphi 0, %s119
      %s123 = sphi 0, %s122
      %s139 = sphi 0, %s123
      %s143 = sphi 0, %s143
      %s145 = sphi 0, %s143
      %s146 = sphi 0, %s145
      %s160 = sphi 0, %s146
      %s166 = sphi 0, %s168
      %s169 = sphi 0, %s166
      %s170 = sphi 0, %s169
      %s186 = sphi 0, %s170
    $region4: #{tpu_custom_call.1} parent=1 // loop_header_branch
      %22 = sbr.rel (%p20) target = $region8
    $region5: #{tpu_custom_call.1} parent=1 // loop_body
      %s24 = ssub.s32 %s19, 1
      %s25 = ssub.s32 %s19, 2
      %s32 = sadd.s32 1, %s27
      %p33 = scmp.ge.s32.totalorder %s32, 6
      %s34 = scalar_select %p33, 0, %s32
      %s35 = sadd.s32 1, %s26
      %s36 = scalar_select %p33, %s35, %s26
      %p37 = scmp.ge.s32.totalorder %s36, 1
      %s38 = scalar_select %p37, 0, %s36
      %s39 = ssub.s32 %s26, %s38
      %p40 = scmp.eq.s32.totalorder %s39, 0
      %s42 = sadd.s32 %s41, 1
      %s43 = scalar_select %p40, %s41, %s42
      %p46 = pneg %p40
      %p47 = scmp.eq.s32.totalorder %s19, 5
      %p48 = por %p46, %p47
      %p49 = scmp.ne.s32.totalorder %s41, %s44
      %p50 = scmp.eq.s32.totalorder %s19, 0
      %p51 = por %p49, %p50
      %p52 = scmp.ne.s32.totalorder %s41, %s44
      %p53 = scmp.eq.s32.totalorder %s24, 5
      %p54 = por %p52, %p53
      %p55 = scmp.ne.s32.totalorder %s44, %s45
      %p56 = scmp.eq.s32.totalorder %s24, 0
      %p57 = por %p55, %p56
      %p58 = scmp.ne.s32.totalorder %s44, %s45
      %p59 = scmp.eq.s32.totalorder %s25, 5
      %p60 = por %p58, %p59
      %p62 = scmp.ne.s32.totalorder %s45, %s61
      %p63 = scmp.eq.s32.totalorder %s25, 0
      %p64 = por %p62, %p63
      %s65 = ssub.s32 %s27, %s34
      %p66 = scmp.eq.s32.totalorder %s65, 0
      %s68 = sadd.s32 %s67, 1
      %s69 = scalar_select %p66, %s67, %s68
      %p72 = pneg %p66
      %p73 = scmp.eq.s32.totalorder %s19, 5
      %p74 = por %p72, %p73
      %p75 = scmp.ne.s32.totalorder %s67, %s70
      %p76 = scmp.eq.s32.totalorder %s19, 0
      %p77 = por %p75, %p76
      %p78 = scmp.ne.s32.totalorder %s67, %s70
      %p79 = scmp.eq.s32.totalorder %s24, 5
      %p80 = por %p78, %p79
      %p81 = scmp.ne.s32.totalorder %s70, %s71
      %p82 = scmp.eq.s32.totalorder %s24, 0
      %p83 = por %p81, %p82
      %p84 = scmp.ne.s32.totalorder %s70, %s71
      %p85 = scmp.eq.s32.totalorder %s25, 5
      %p86 = por %p84, %p85
      %p88 = scmp.ne.s32.totalorder %s71, %s87
      %p89 = scmp.eq.s32.totalorder %s25, 0
      %p90 = por %p88, %p89
      %s91 = ssub.s32 %s27, %s34
      %p92 = scmp.eq.s32.totalorder %s91, 0
      %s94 = sadd.s32 %s93, 1
      %s95 = scalar_select %p92, %s93, %s94
      %p98 = pneg %p92
      %p99 = scmp.eq.s32.totalorder %s19, 5
      %p100 = por %p98, %p99
      %p101 = scmp.ne.s32.totalorder %s93, %s96
      %p102 = scmp.eq.s32.totalorder %s19, 0
      %p103 = por %p101, %p102
      %p104 = scmp.ne.s32.totalorder %s93, %s96
      %p105 = scmp.eq.s32.totalorder %s24, 5
      %p106 = por %p104, %p105
      %p107 = scmp.ne.s32.totalorder %s96, %s97
      %p108 = scmp.eq.s32.totalorder %s24, 0
      %p109 = por %p107, %p108
      %p110 = scmp.ne.s32.totalorder %s96, %s97
      %p111 = scmp.eq.s32.totalorder %s25, 5
      %p112 = por %p110, %p111
      %p114 = scmp.ne.s32.totalorder %s97, %s113
      %p115 = scmp.eq.s32.totalorder %s25, 0
      %p116 = por %p114, %p115
      %s117 = ssub.s32 %s27, %s34
      %p118 = scmp.eq.s32.totalorder %s117, 0
      %s120 = sadd.s32 %s119, 1
      %s121 = scalar_select %p118, %s119, %s120
      %p124 = pneg %p118
      %p125 = scmp.eq.s32.totalorder %s19, 5
      %p126 = por %p124, %p125
      %p127 = scmp.ne.s32.totalorder %s119, %s122
      %p128 = scmp.eq.s32.totalorder %s19, 0
      %p129 = por %p127, %p128
      %p130 = scmp.ne.s32.totalorder %s119, %s122
      %p131 = scmp.eq.s32.totalorder %s24, 5
      %p132 = por %p130, %p131
      %p133 = scmp.ne.s32.totalorder %s122, %s123
      %p134 = scmp.eq.s32.totalorder %s24, 0
      %p135 = por %p133, %p134
      %p136 = scmp.ne.s32.totalorder %s122, %s123
      %p137 = scmp.eq.s32.totalorder %s25, 5
      %p138 = por %p136, %p137
      %p140 = scmp.ne.s32.totalorder %s123, %s139
      %p141 = scmp.eq.s32.totalorder %s25, 0
      %p142 = por %p140, %p141
      %s144 = sadd.s32 %s143, 1
      %p147 = scmp.eq.s32.totalorder %s19, 5
      %p148 = scmp.ne.s32.totalorder %s143, %s145
      %p149 = scmp.eq.s32.totalorder %s19, 0
      %p150 = por %p148, %p149
      %p151 = scmp.ne.s32.totalorder %s143, %s145
      %p152 = scmp.eq.s32.totalorder %s24, 5
      %p153 = por %p151, %p152
      %p154 = scmp.ne.s32.totalorder %s145, %s146
      %p155 = scmp.eq.s32.totalorder %s24, 0
      %p156 = por %p154, %p155
      %p157 = scmp.ne.s32.totalorder %s145, %s146
      %p158 = scmp.eq.s32.totalorder %s25, 5
      %p159 = por %p157, %p158
      %p161 = scmp.ne.s32.totalorder %s146, %s160
      %p162 = scmp.eq.s32.totalorder %s25, 0
      %p163 = por %p161, %p162
      %s164 = ssub.s32 %s26, %s38
      %p165 = scmp.eq.s32.totalorder %s164, 0
      %s167 = sadd.s32 %s166, 1
      %s168 = scalar_select %p165, %s166, %s167
      %p171 = pneg %p165
      %p172 = scmp.eq.s32.totalorder %s19, 5
      %p173 = por %p171, %p172
      %p174 = scmp.ne.s32.totalorder %s166, %s169
      %p175 = scmp.eq.s32.totalorder %s19, 0
      %p176 = por %p174, %p175
      %p177 = scmp.ne.s32.totalorder %s166, %s169
      %p178 = scmp.eq.s32.totalorder %s24, 5
      %p179 = por %p177, %p178
      %p180 = scmp.ne.s32.totalorder %s169, %s170
      %p181 = scmp.eq.s32.totalorder %s24, 0
      %p182 = por %p180, %p181
      %p183 = scmp.ne.s32.totalorder %s169, %s170
      %p184 = scmp.eq.s32.totalorder %s25, 5
      %p185 = por %p183, %p184
      %p187 = scmp.ne.s32.totalorder %s170, %s186
      %p188 = scmp.eq.s32.totalorder %s25, 0
      %p189 = por %p187, %p188
      %p190 = scmp.le.s32.totalorder 1, %s19
      %p191 = scmp.lt.s32.totalorder %s19, 7
      %p192 = pnand %p190, %p191
      %p193 = pneg %p192
      // Predicated region
      $region9: #{tpu_custom_call.1} parent=5 // pred_check
        _
      $region10: #{tpu_custom_call.1} parent=5 // pred_check_branch
        %195 = sbr.rel (%p192) target = $region12
      $region11: #{tpu_custom_call.1} parent=5 // pred_region
        %s196 = ssub.s32 %s19, 1
        // Predicated region
        $region13: #{tpu_custom_call.1} parent=11 // pred_check
          %p197 = pneg %p57
        $region14: #{tpu_custom_call.1} parent=11 // pred_check_branch
          %199 = sbr.rel (%p197) target = $region16
        $region15: #{tpu_custom_call.1} parent=11 // pred_region
          %s200 = smul.u32 2, %s28
          %s202 = ssub.s32 768, 768
          %203 = vsyncadd [#allocation4], %s202
          %s204 = smul.addr %s200, 6
          %s205 = smul.addr %s204, 64
          %s206 = scalar_lea.hbm %s0, %s205
          %s207 = sshll.u32 [#allocation3], 4
          %s208 = int_to_ptr.vmem [resolvable:$true] %s207
          %213 = dma.hbm_to_vmem [thread:$0]  %s206, 768, %s208, [#allocation4], 384, 384, 24
        $region16: #{tpu_custom_call.1} parent=11 // pred_fallthru
          _
        // Predicated region
        $region17: #{tpu_custom_call.1} parent=11 // pred_check
          %p214 = pneg %p156
        $region18: #{tpu_custom_call.1} parent=11 // pred_check_branch
          %216 = sbr.rel (%p214) target = $region20
        $region19: #{tpu_custom_call.1} parent=11 // pred_region
          %s218 = ssub.s32 96, 96
          %219 = vsyncadd [#allocation10], %s218
          %s221 = sshll.u32 [#allocation11], 4
          %s222 = int_to_ptr.vmem [resolvable:$true] %s221
          %224 = dma.hbm_to_vmem [thread:$0]  %s4, 96, %s222, [#allocation10]
        $region20: #{tpu_custom_call.1} parent=11 // pred_fallthru
          _
      $region12: #{tpu_custom_call.1} parent=5 // pred_fallthru
        _
      %p225 = scmp.lt.s32.totalorder %s19, 6
      // Predicated region
      $region21: #{tpu_custom_call.1} parent=5 // pred_check
        %p226 = pneg %p225
      $region22: #{tpu_custom_call.1} parent=5 // pred_check_branch
        %228 = sbr.rel (%p226) target = $region24
      $region23: #{tpu_custom_call.1} parent=5 // pred_region
        // Predicated region
        $region25: #{tpu_custom_call.1} parent=23 // pred_check
          %p229 = pneg %p77
        $region26: #{tpu_custom_call.1} parent=23 // pred_check_branch
          %231 = sbr.rel (%p229) target = $region28
        $region27: #{tpu_custom_call.1} parent=23 // pred_region
          %s232 = sand.u32 %s19, 1
          %s233 = scalar_lea.sflag [#allocation7], %s232
          %s234 = sand.u32 %s67, 1
          %s235 = smul.addr %s234, 1536
          %s236 = scalar_lea.vmem [#allocation6], %s235
          %s237 = smul.u32 4, %s27
          %s239 = ssub.s32 24576, 24576
          %240 = vsyncadd %s233, %s239
          %s241 = smul.addr %s237, 64
          %s242 = scalar_lea.hbm %s1, %s241
          %s243 = sshll.u32 %s236, 4
          %s244 = int_to_ptr.vmem [resolvable:$true] %s243
          %249 = dma.hbm_to_vmem [thread:$0]  %s242, 24576, %s244, %s233, 1536, 256, 16
        $region28: #{tpu_custom_call.1} parent=23 // pred_fallthru
          _
        // Predicated region
        $region29: #{tpu_custom_call.1} parent=23 // pred_check
          %p250 = pneg %p103
        $region30: #{tpu_custom_call.1} parent=23 // pred_check_branch
          %252 = sbr.rel (%p250) target = $region32
        $region31: #{tpu_custom_call.1} parent=23 // pred_region
          %s253 = sand.u32 %s19, 1
          %s254 = scalar_lea.sflag [#allocation7], %s253
          %s255 = sand.u32 %s93, 1
          %s256 = smul.addr %s255, 4
          %s257 = scalar_lea.vmem [#allocation8], %s256
          %s258 = smul.u32 4, %s27
          %s260 = ssub.s32 64, 64
          %261 = vsyncadd %s254, %s260
          %s262 = smul.addr %s258, 16
          %s263 = scalar_lea.hbm %s2, %s262
          %s265 = sshll.u32 %s257, 4
          %s266 = int_to_ptr.vmem [resolvable:$true] %s265
          %268 = dma.hbm_to_vmem [thread:$0]  %s263, 64, %s266, %s254
        $region32: #{tpu_custom_call.1} parent=23 // pred_fallthru
          _
        // Predicated region
        $region33: #{tpu_custom_call.1} parent=23 // pred_check
          %p269 = pneg %p129
        $region34: #{tpu_custom_call.1} parent=23 // pred_check_branch
          %271 = sbr.rel (%p269) target = $region36
        $region35: #{tpu_custom_call.1} parent=23 // pred_region
          %s272 = sand.u32 %s19, 1
          %s273 = scalar_lea.sflag [#allocation10], %s272
          %s274 = sand.u32 %s119, 1
          %s275 = smul.addr %s274, 1536
          %s276 = scalar_lea.vmem [#allocation9], %s275
          %s277 = smul.u32 64, %s27
          %s279 = ssub.s32 24576, 24576
          %280 = vsyncadd %s273, %s279
          %s281 = smul.addr %s277, 6
          %s282 = smul.addr %s281, 64
          %s283 = scalar_lea.hbm %s3, %s282
          %s284 = sshll.u32 %s276, 4
          %s285 = int_to_ptr.vmem [resolvable:$true] %s284
          %290 = dma.hbm_to_vmem [thread:$0]  %s283, 24576, %s285, %s273, 384, 384, 24
        $region36: #{tpu_custom_call.1} parent=23 // pred_fallthru
          _
      $region24: #{tpu_custom_call.1} parent=5 // pred_fallthru
        _
      %p291 = scmp.le.s32.totalorder 1, %s19
      %p292 = scmp.lt.s32.totalorder %s19, 7
      %p293 = pnand %p291, %p292
      %p294 = pneg %p293
      // Predicated region
      $region37: #{tpu_custom_call.1} parent=5 // pred_check
        _
      $region38: #{tpu_custom_call.1} parent=5 // pred_check_branch
        %296 = sbr.rel (%p293) target = $region40
      $region39: #{tpu_custom_call.1} parent=5 // pred_region
        %s297 = ssub.s32 %s19, 1
        // Predicated region
        $region41: #{tpu_custom_call.1} parent=39 // pred_check
          %p298 = pneg %p57
        $region42: #{tpu_custom_call.1} parent=39 // pred_check_branch
          %300 = sbr.rel (%p298) target = $region44
        $region43: #{tpu_custom_call.1} parent=39 // pred_region
          %301 = dma.done [#allocation4], 768
        $region44: #{tpu_custom_call.1} parent=39 // pred_fallthru
          _
        %s302 = sand.u32 %s24, 1
        %s303 = scalar_lea.sflag [#allocation7], %s302
        %s304 = sand.u32 %s70, 1
        %s305 = smul.addr %s304, 1536
        %s306 = scalar_lea.vmem [#allocation6], %s305
        // Predicated region
        $region45: #{tpu_custom_call.1} parent=39 // pred_check
          %p307 = pneg %p83
        $region46: #{tpu_custom_call.1} parent=39 // pred_check_branch
          %309 = sbr.rel (%p307) target = $region48
        $region47: #{tpu_custom_call.1} parent=39 // pred_region
          %310 = dma.done %s303, 24576
        $region48: #{tpu_custom_call.1} parent=39 // pred_fallthru
          _
        %s311 = sand.u32 %s24, 1
        %s312 = scalar_lea.sflag [#allocation7], %s311
        %s313 = sand.u32 %s96, 1
        %s314 = smul.addr %s313, 4
        %s315 = scalar_lea.vmem [#allocation8], %s314
        // Predicated region
        $region49: #{tpu_custom_call.1} parent=39 // pred_check
          %p316 = pneg %p109
        $region50: #{tpu_custom_call.1} parent=39 // pred_check_branch
          %318 = sbr.rel (%p316) target = $region52
        $region51: #{tpu_custom_call.1} parent=39 // pred_region
          %319 = dma.done %s312, 64
        $region52: #{tpu_custom_call.1} parent=39 // pred_fallthru
          _
        %s320 = sand.u32 %s24, 1
        %s321 = scalar_lea.sflag [#allocation10], %s320
        %s322 = sand.u32 %s122, 1
        %s323 = smul.addr %s322, 1536
        %s324 = scalar_lea.vmem [#allocation9], %s323
        // Predicated region
        $region53: #{tpu_custom_call.1} parent=39 // pred_check
          %p325 = pneg %p135
        $region54: #{tpu_custom_call.1} parent=39 // pred_check_branch
          %327 = sbr.rel (%p325) target = $region56
        $region55: #{tpu_custom_call.1} parent=39 // pred_region
          %328 = dma.done %s321, 24576
        $region56: #{tpu_custom_call.1} parent=39 // pred_fallthru
          _
        // Predicated region
        $region57: #{tpu_custom_call.1} parent=39 // pred_check
          %p329 = pneg %p156
        $region58: #{tpu_custom_call.1} parent=39 // pred_check_branch
          %331 = sbr.rel (%p329) target = $region60
        $region59: #{tpu_custom_call.1} parent=39 // pred_region
          %332 = dma.done [#allocation10], 96
        $region60: #{tpu_custom_call.1} parent=39 // pred_fallthru
          _
        %p333 = pneg %p57
        %p334 = pneg %p54
        %s335 = sand.u32 %s24, 1
        %s336 = scalar_lea.sflag [#allocation7], %s335
        %s337 = sand.u32 %s70, 1
        %s338 = smul.addr %s337, 1536
        %s339 = scalar_lea.vmem [#allocation6], %s338
        %p340 = pneg %p83
        %p341 = pneg %p80
        %s342 = sand.u32 %s24, 1
        %s343 = scalar_lea.sflag [#allocation7], %s342
        %s344 = sand.u32 %s96, 1
        %s345 = smul.addr %s344, 4
        %s346 = scalar_lea.vmem [#allocation8], %s345
        %p347 = pneg %p109
        %p348 = pneg %p106
        %s349 = sand.u32 %s24, 1
        %s350 = scalar_lea.sflag [#allocation10], %s349
        %s351 = sand.u32 %s122, 1
        %s352 = smul.addr %s351, 1536
        %s353 = scalar_lea.vmem [#allocation9], %s352
        %p354 = pneg %p135
        %p355 = pneg %p132
        %p356 = pneg %p156
        %p357 = pneg %p153
        %p358 = pneg %p182
        %p359 = pneg %p179
        %s360 = smul.u32 2, %s28
        %s361 = smul.u32 4, %s29
        %s362 = smul.u32 4, %s29
        %s363 = smul.u32 64, %s29
        %s364 = smul.u32 2, %s28
        %p365 = scmp.eq.s32.totalorder %s29, 0
        // Predicated region
        $region61: #{tpu_custom_call.1} parent=39 // pred_check
          %p366 = pneg %p365
        $region62: #{tpu_custom_call.1} parent=39 // pred_check_branch
          %368 = sbr.rel (%p366) target = $region64
        $region63: #{tpu_custom_call.1} parent=39 // pred_region
          %369 = vst [vmem:[#allocation2] sm:$0xff] 0.0
          %370 = vst [vmem:[#allocation2 + $0x8] sm:$0xff] 0.0
          %371 = vst [vmem:[#allocation2 + $0x10] sm:$0xff] 0.0
          %372 = vst [vmem:[#allocation2 + $0x18] sm:$0xff] 0.0
          %373 = vst [vmem:[#allocation2 + $0x20] sm:$0xff] 0.0
          %374 = vst [vmem:[#allocation2 + $0x28] sm:$0xff] 0.0
          %375 = vst [vmem:[#allocation2 + $0x30] sm:$0xff] 0.0
          %376 = vst [vmem:[#allocation2 + $0x38] sm:$0xff] 0.0
          %377 = vst [vmem:[#allocation2 + $0x40] sm:$0xff] 0.0
          %378 = vst [vmem:[#allocation2 + $0x48] sm:$0xff] 0.0
          %379 = vst [vmem:[#allocation2 + $0x50] sm:$0xff] 0.0
          %380 = vst [vmem:[#allocation2 + $0x58] sm:$0xff] 0.0
        $region64: #{tpu_custom_call.1} parent=39 // pred_fallthru
          _
        %v381 = vld [vmem:[#allocation3] sm:$0xff]
        %v382 = vld [vmem:[#allocation3 + $0x8] sm:$0xff]
        %v383 = vld [vmem:[#allocation3 + $0x10] sm:$0xff]
        %v384 = vld [vmem:[#allocation3 + $0x18] sm:$0xff]
        %v385 = vld [vmem:[#allocation3 + $0x20] sm:$0xff]
        %v386 = vld [vmem:[#allocation3 + $0x28] sm:$0xff]
        %v387 = vld [vmem:[%s306] sm:$0xff]
        %v388 = vld [vmem:[%s306 + $0x8] sm:$0xff]
        %v389 = vld [vmem:[%s306 + $0x10] sm:$0xff]
        %v390 = vld [vmem:[%s306 + $0x18] sm:$0xff]
        %v391 = vld [vmem:[%s306 + $0x20] sm:$0xff]
        %v392 = vld [vmem:[%s306 + $0x28] sm:$0xff]
        %v393 = vld [vmem:[%s306 + $0x30] sm:$0xff]
        %v394 = vld [vmem:[%s306 + $0x38] sm:$0xff]
        %v395 = vld [vmem:[%s306 + $0x40] sm:$0xff]
        %v396 = vld [vmem:[%s306 + $0x48] sm:$0xff]
        %v397 = vld [vmem:[%s306 + $0x50] sm:$0xff]
        %v398 = vld [vmem:[%s306 + $0x58] sm:$0xff]
        %v399 = vld [vmem:[%s306 + $0x60] sm:$0xff]
        %v400 = vld [vmem:[%s306 + $0x68] sm:$0xff]
        %v401 = vld [vmem:[%s306 + $0x70] sm:$0xff]
        %v402 = vld [vmem:[%s306 + $0x78] sm:$0xff]
        %v403 = vld [vmem:[%s306 + $0x80] sm:$0xff]
        %v404 = vld [vmem:[%s306 + $0x88] sm:$0xff]
        %v405 = vld [vmem:[%s306 + $0x90] sm:$0xff]
        %v406 = vld [vmem:[%s306 + $0x98] sm:$0xff]
        %v407 = vld [vmem:[%s306 + $0xa0] sm:$0xff]
        %v408 = vld [vmem:[%s306 + $0xa8] sm:$0xff]
        %v409 = vld [vmem:[%s306 + $0xb0] sm:$0xff]
        %v410 = vld [vmem:[%s306 + $0xb8] sm:$0xff]
        %v411 = vld [vmem:[%s306 + $0xc0] sm:$0xff]
        %v412 = vld [vmem:[%s306 + $0xc8] sm:$0xff]
        %v413 = vld [vmem:[%s306 + $0xd0] sm:$0xff]
        %v414 = vld [vmem:[%s306 + $0xd8] sm:$0xff]
        %v415 = vld [vmem:[%s306 + $0xe0] sm:$0xff]
        %v416 = vld [vmem:[%s306 + $0xe8] sm:$0xff]
        %v417 = vld [vmem:[%s306 + $0xf0] sm:$0xff]
        %v418 = vld [vmem:[%s306 + $0xf8] sm:$0xff]
        %v419 = vld [vmem:[%s306 + $0x100] sm:$0xff]
        %v420 = vld [vmem:[%s306 + $0x108] sm:$0xff]
        %v421 = vld [vmem:[%s306 + $0x110] sm:$0xff]
        %v422 = vld [vmem:[%s306 + $0x118] sm:$0xff]
        %v423 = vld [vmem:[%s306 + $0x120] sm:$0xff]
        %v424 = vld [vmem:[%s306 + $0x128] sm:$0xff]
        %v425 = vld [vmem:[%s306 + $0x130] sm:$0xff]
        %v426 = vld [vmem:[%s306 + $0x138] sm:$0xff]
        %v427 = vld [vmem:[%s306 + $0x140] sm:$0xff]
        %v428 = vld [vmem:[%s306 + $0x148] sm:$0xff]
        %v429 = vld [vmem:[%s306 + $0x150] sm:$0xff]
        %v430 = vld [vmem:[%s306 + $0x158] sm:$0xff]
        %v431 = vld [vmem:[%s306 + $0x160] sm:$0xff]
        %v432 = vld [vmem:[%s306 + $0x168] sm:$0xff]
        %v433 = vld [vmem:[%s306 + $0x170] sm:$0xff]
        %v434 = vld [vmem:[%s306 + $0x178] sm:$0xff]
        %v435 = vld [vmem:[%s306 + $0x180] sm:$0xff]
        %v436 = vld [vmem:[%s306 + $0x188] sm:$0xff]
        %v437 = vld [vmem:[%s306 + $0x190] sm:$0xff]
        %v438 = vld [vmem:[%s306 + $0x198] sm:$0xff]
        %v439 = vld [vmem:[%s306 + $0x1a0] sm:$0xff]
        %v440 = vld [vmem:[%s306 + $0x1a8] sm:$0xff]
        %v441 = vld [vmem:[%s306 + $0x1b0] sm:$0xff]
        %v442 = vld [vmem:[%s306 + $0x1b8] sm:$0xff]
        %v443 = vld [vmem:[%s306 + $0x1c0] sm:$0xff]
        %v444 = vld [vmem:[%s306 + $0x1c8] sm:$0xff]
        %v445 = vld [vmem:[%s306 + $0x1d0] sm:$0xff]
        %v446 = vld [vmem:[%s306 + $0x1d8] sm:$0xff]
        %v447 = vld [vmem:[%s306 + $0x1e0] sm:$0xff]
        %v448 = vld [vmem:[%s306 + $0x1e8] sm:$0xff]
        %v449 = vld [vmem:[%s306 + $0x1f0] sm:$0xff]
        %v450 = vld [vmem:[%s306 + $0x1f8] sm:$0xff]
        %v451 = vld [vmem:[%s306 + $0x200] sm:$0xff]
        %v452 = vld [vmem:[%s306 + $0x208] sm:$0xff]
        %v453 = vld [vmem:[%s306 + $0x210] sm:$0xff]
        %v454 = vld [vmem:[%s306 + $0x218] sm:$0xff]
        %v455 = vld [vmem:[%s306 + $0x220] sm:$0xff]
        %v456 = vld [vmem:[%s306 + $0x228] sm:$0xff]
        %v457 = vld [vmem:[%s306 + $0x230] sm:$0xff]
        %v458 = vld [vmem:[%s306 + $0x238] sm:$0xff]
        %v459 = vld [vmem:[%s306 + $0x240] sm:$0xff]
        %v460 = vld [vmem:[%s306 + $0x248] sm:$0xff]
        %v461 = vld [vmem:[%s306 + $0x250] sm:$0xff]
        %v462 = vld [vmem:[%s306 + $0x258] sm:$0xff]
        %v463 = vld [vmem:[%s306 + $0x260] sm:$0xff]
        %v464 = vld [vmem:[%s306 + $0x268] sm:$0xff]
        %v465 = vld [vmem:[%s306 + $0x270] sm:$0xff]
        %v466 = vld [vmem:[%s306 + $0x278] sm:$0xff]
        %v467 = vld [vmem:[%s306 + $0x280] sm:$0xff]
        %v468 = vld [vmem:[%s306 + $0x288] sm:$0xff]
        %v469 = vld [vmem:[%s306 + $0x290] sm:$0xff]
        %v470 = vld [vmem:[%s306 + $0x298] sm:$0xff]
        %v471 = vld [vmem:[%s306 + $0x2a0] sm:$0xff]
        %v472 = vld [vmem:[%s306 + $0x2a8] sm:$0xff]
        %v473 = vld [vmem:[%s306 + $0x2b0] sm:$0xff]
        %v474 = vld [vmem:[%s306 + $0x2b8] sm:$0xff]
        %v475 = vld [vmem:[%s306 + $0x2c0] sm:$0xff]
        %v476 = vld [vmem:[%s306 + $0x2c8] sm:$0xff]
        %v477 = vld [vmem:[%s306 + $0x2d0] sm:$0xff]
        %v478 = vld [vmem:[%s306 + $0x2d8] sm:$0xff]
        %v479 = vld [vmem:[%s306 + $0x2e0] sm:$0xff]
        %v480 = vld [vmem:[%s306 + $0x2e8] sm:$0xff]
        %v481 = vld [vmem:[%s306 + $0x2f0] sm:$0xff]
        %v482 = vld [vmem:[%s306 + $0x2f8] sm:$0xff]
        %v483 = vld [vmem:[%s306 + $0x300] sm:$0xff]
        %v484 = vld [vmem:[%s306 + $0x308] sm:$0xff]
        %v485 = vld [vmem:[%s306 + $0x310] sm:$0xff]
        %v486 = vld [vmem:[%s306 + $0x318] sm:$0xff]
        %v487 = vld [vmem:[%s306 + $0x320] sm:$0xff]
        %v488 = vld [vmem:[%s306 + $0x328] sm:$0xff]
        %v489 = vld [vmem:[%s306 + $0x330] sm:$0xff]
        %v490 = vld [vmem:[%s306 + $0x338] sm:$0xff]
        %v491 = vld [vmem:[%s306 + $0x340] sm:$0xff]
        %v492 = vld [vmem:[%s306 + $0x348] sm:$0xff]
        %v493 = vld [vmem:[%s306 + $0x350] sm:$0xff]
        %v494 = vld [vmem:[%s306 + $0x358] sm:$0xff]
        %v495 = vld [vmem:[%s306 + $0x360] sm:$0xff]
        %v496 = vld [vmem:[%s306 + $0x368] sm:$0xff]
        %v497 = vld [vmem:[%s306 + $0x370] sm:$0xff]
        %v498 = vld [vmem:[%s306 + $0x378] sm:$0xff]
        %v499 = vld [vmem:[%s306 + $0x380] sm:$0xff]
        %v500 = vld [vmem:[%s306 + $0x388] sm:$0xff]
        %v501 = vld [vmem:[%s306 + $0x390] sm:$0xff]
        %v502 = vld [vmem:[%s306 + $0x398] sm:$0xff]
        %v503 = vld [vmem:[%s306 + $0x3a0] sm:$0xff]
        %v504 = vld [vmem:[%s306 + $0x3a8] sm:$0xff]
        %v505 = vld [vmem:[%s306 + $0x3b0] sm:$0xff]
        %v506 = vld [vmem:[%s306 + $0x3b8] sm:$0xff]
        %v507 = vld [vmem:[%s306 + $0x3c0] sm:$0xff]
        %v508 = vld [vmem:[%s306 + $0x3c8] sm:$0xff]
        %v509 = vld [vmem:[%s306 + $0x3d0] sm:$0xff]
        %v510 = vld [vmem:[%s306 + $0x3d8] sm:$0xff]
        %v511 = vld [vmem:[%s306 + $0x3e0] sm:$0xff]
        %v512 = vld [vmem:[%s306 + $0x3e8] sm:$0xff]
        %v513 = vld [vmem:[%s306 + $0x3f0] sm:$0xff]
        %v514 = vld [vmem:[%s306 + $0x3f8] sm:$0xff]
        %v515 = vld [vmem:[%s306 + $0x400] sm:$0xff]
        %v516 = vld [vmem:[%s306 + $0x408] sm:$0xff]
        %v517 = vld [vmem:[%s306 + $0x410] sm:$0xff]
        %v518 = vld [vmem:[%s306 + $0x418] sm:$0xff]
        %v519 = vld [vmem:[%s306 + $0x420] sm:$0xff]
        %v520 = vld [vmem:[%s306 + $0x428] sm:$0xff]
        %v521 = vld [vmem:[%s306 + $0x430] sm:$0xff]
        %v522 = vld [vmem:[%s306 + $0x438] sm:$0xff]
        %v523 = vld [vmem:[%s306 + $0x440] sm:$0xff]
        %v524 = vld [vmem:[%s306 + $0x448] sm:$0xff]
        %v525 = vld [vmem:[%s306 + $0x450] sm:$0xff]
        %v526 = vld [vmem:[%s306 + $0x458] sm:$0xff]
        %v527 = vld [vmem:[%s306 + $0x460] sm:$0xff]
        %v528 = vld [vmem:[%s306 + $0x468] sm:$0xff]
        %v529 = vld [vmem:[%s306 + $0x470] sm:$0xff]
        %v530 = vld [vmem:[%s306 + $0x478] sm:$0xff]
        %v531 = vld [vmem:[%s306 + $0x480] sm:$0xff]
        %v532 = vld [vmem:[%s306 + $0x488] sm:$0xff]
        %v533 = vld [vmem:[%s306 + $0x490] sm:$0xff]
        %v534 = vld [vmem:[%s306 + $0x498] sm:$0xff]
        %v535 = vld [vmem:[%s306 + $0x4a0] sm:$0xff]
        %v536 = vld [vmem:[%s306 + $0x4a8] sm:$0xff]
        %v537 = vld [vmem:[%s306 + $0x4b0] sm:$0xff]
        %v538 = vld [vmem:[%s306 + $0x4b8] sm:$0xff]
        %v539 = vld [vmem:[%s306 + $0x4c0] sm:$0xff]
        %v540 = vld [vmem:[%s306 + $0x4c8] sm:$0xff]
        %v541 = vld [vmem:[%s306 + $0x4d0] sm:$0xff]
        %v542 = vld [vmem:[%s306 + $0x4d8] sm:$0xff]
        %v543 = vld [vmem:[%s306 + $0x4e0] sm:$0xff]
        %v544 = vld [vmem:[%s306 + $0x4e8] sm:$0xff]
        %v545 = vld [vmem:[%s306 + $0x4f0] sm:$0xff]
        %v546 = vld [vmem:[%s306 + $0x4f8] sm:$0xff]
        %v547 = vld [vmem:[%s306 + $0x500] sm:$0xff]
        %v548 = vld [vmem:[%s306 + $0x508] sm:$0xff]
        %v549 = vld [vmem:[%s306 + $0x510] sm:$0xff]
        %v550 = vld [vmem:[%s306 + $0x518] sm:$0xff]
        %v551 = vld [vmem:[%s306 + $0x520] sm:$0xff]
        %v552 = vld [vmem:[%s306 + $0x528] sm:$0xff]
        %v553 = vld [vmem:[%s306 + $0x530] sm:$0xff]
        %v554 = vld [vmem:[%s306 + $0x538] sm:$0xff]
        %v555 = vld [vmem:[%s306 + $0x540] sm:$0xff]
        %v556 = vld [vmem:[%s306 + $0x548] sm:$0xff]
        %v557 = vld [vmem:[%s306 + $0x550] sm:$0xff]
        %v558 = vld [vmem:[%s306 + $0x558] sm:$0xff]
        %v559 = vld [vmem:[%s306 + $0x560] sm:$0xff]
        %v560 = vld [vmem:[%s306 + $0x568] sm:$0xff]
        %v561 = vld [vmem:[%s306 + $0x570] sm:$0xff]
        %v562 = vld [vmem:[%s306 + $0x578] sm:$0xff]
        %v563 = vld [vmem:[%s306 + $0x580] sm:$0xff]
        %v564 = vld [vmem:[%s306 + $0x588] sm:$0xff]
        %v565 = vld [vmem:[%s306 + $0x590] sm:$0xff]
        %v566 = vld [vmem:[%s306 + $0x598] sm:$0xff]
        %v567 = vld [vmem:[%s306 + $0x5a0] sm:$0xff]
        %v568 = vld [vmem:[%s306 + $0x5a8] sm:$0xff]
        %v569 = vld [vmem:[%s306 + $0x5b0] sm:$0xff]
        %v570 = vld [vmem:[%s306 + $0x5b8] sm:$0xff]
        %v571 = vld [vmem:[%s306 + $0x5c0] sm:$0xff]
        %v572 = vld [vmem:[%s306 + $0x5c8] sm:$0xff]
        %v573 = vld [vmem:[%s306 + $0x5d0] sm:$0xff]
        %v574 = vld [vmem:[%s306 + $0x5d8] sm:$0xff]
        %v575 = vld [vmem:[%s306 + $0x5e0] sm:$0xff]
        %v576 = vld [vmem:[%s306 + $0x5e8] sm:$0xff]
        %v577 = vld [vmem:[%s306 + $0x5f0] sm:$0xff]
        %v578 = vld [vmem:[%s306 + $0x5f8] sm:$0xff]
        %v579 = vld [vmem:[%s315] sm:$0xf]
        %v581 = vlaneseq
        %v582 = vshrl.u32 %v581, 7
        %v583 = vsub.s32 0, %v582
        %v584 = vrot.slane %v579, %v583
        %v585 = vlaneseq
        %v586 = vshrl.u32 %v585, 7
        %v587 = vsub.s32 1, %v586
        %v588 = vrot.slane %v579, %v587
        %v589 = vlaneseq
        %v590 = vshrl.u32 %v589, 7
        %v591 = vsub.s32 2, %v590
        %v592 = vrot.slane %v579, %v591
        %v593 = vlaneseq
        %v594 = vshrl.u32 %v593, 7
        %v595 = vsub.s32 3, %v594
        %v596 = vrot.slane %v579, %v595
        %v607 = vunpack.c.l.b16 %v381
        %v608 = vunpack.c.h.b16 %v381
        %v609 = vunpack.c.l.b16 %v382
        %v610 = vunpack.c.h.b16 %v382
        %v611 = vunpack.c.l.b16 %v383
        %v612 = vunpack.c.h.b16 %v383
        %v613 = vunpack.c.l.b16 %v384
        %v614 = vunpack.c.h.b16 %v384
        %v615 = vunpack.c.l.b16 %v385
        %v616 = vunpack.c.h.b16 %v385
        %v617 = vunpack.c.l.b16 %v386
        %v618 = vunpack.c.h.b16 %v386
        %v619 = vpack.c.b16 %v613, %v607
        %v620 = vpack.c.b16 %v614, %v608
        %v621 = vpack.c.b16 %v615, %v609
        %v622 = vpack.c.b16 %v616, %v610
        %v623 = vpack.c.b16 %v617, %v611
        %v624 = vpack.c.b16 %v618, %v612
        %v823 = vunpack.c.l.b16 %v387
        %v824 = vunpack.c.h.b16 %v387
        %v825 = vunpack.c.l.b16 %v388
        %v826 = vunpack.c.h.b16 %v388
        %v827 = vunpack.c.l.b16 %v389
        %v828 = vunpack.c.h.b16 %v389
        %v829 = vunpack.c.l.b16 %v390
        %v830 = vunpack.c.h.b16 %v390
        %v831 = vunpack.c.l.b16 %v391
        %v832 = vunpack.c.h.b16 %v391
        %v833 = vunpack.c.l.b16 %v392
        %v834 = vunpack.c.h.b16 %v392
        %v835 = vunpack.c.l.b16 %v393
        %v836 = vunpack.c.h.b16 %v393
        %v837 = vunpack.c.l.b16 %v394
        %v838 = vunpack.c.h.b16 %v394
        %v839 = vunpack.c.l.b16 %v395
        %v840 = vunpack.c.h.b16 %v395
        %v841 = vunpack.c.l.b16 %v396
        %v842 = vunpack.c.h.b16 %v396
        %v843 = vunpack.c.l.b16 %v397
        %v844 = vunpack.c.h.b16 %v397
        %v845 = vunpack.c.l.b16 %v398
        %v846 = vunpack.c.h.b16 %v398
        %v847 = vunpack.c.l.b16 %v399
        %v848 = vunpack.c.h.b16 %v399
        %v849 = vunpack.c.l.b16 %v400
        %v850 = vunpack.c.h.b16 %v400
        %v851 = vunpack.c.l.b16 %v401
        %v852 = vunpack.c.h.b16 %v401
        %v853 = vunpack.c.l.b16 %v402
        %v854 = vunpack.c.h.b16 %v402
        %v855 = vunpack.c.l.b16 %v403
        %v856 = vunpack.c.h.b16 %v403
        %v857 = vunpack.c.l.b16 %v404
        %v858 = vunpack.c.h.b16 %v404
        %v859 = vunpack.c.l.b16 %v405
        %v860 = vunpack.c.h.b16 %v405
        %v861 = vunpack.c.l.b16 %v406
        %v862 = vunpack.c.h.b16 %v406
        %v863 = vunpack.c.l.b16 %v407
        %v864 = vunpack.c.h.b16 %v407
        %v865 = vunpack.c.l.b16 %v408
        %v866 = vunpack.c.h.b16 %v408
        %v867 = vunpack.c.l.b16 %v409
        %v868 = vunpack.c.h.b16 %v409
        %v869 = vunpack.c.l.b16 %v410
        %v870 = vunpack.c.h.b16 %v410
        %v871 = vunpack.c.l.b16 %v411
        %v872 = vunpack.c.h.b16 %v411
        %v873 = vunpack.c.l.b16 %v412
        %v874 = vunpack.c.h.b16 %v412
        %v875 = vunpack.c.l.b16 %v413
        %v876 = vunpack.c.h.b16 %v413
        %v877 = vunpack.c.l.b16 %v414
        %v878 = vunpack.c.h.b16 %v414
        %v879 = vunpack.c.l.b16 %v415
        %v880 = vunpack.c.h.b16 %v415
        %v881 = vunpack.c.l.b16 %v416
        %v882 = vunpack.c.h.b16 %v416
        %v883 = vunpack.c.l.b16 %v417
        %v884 = vunpack.c.h.b16 %v417
        %v885 = vunpack.c.l.b16 %v418
        %v886 = vunpack.c.h.b16 %v418
        %v887 = vunpack.c.l.b16 %v419
        %v888 = vunpack.c.h.b16 %v419
        %v889 = vunpack.c.l.b16 %v420
        %v890 = vunpack.c.h.b16 %v420
        %v891 = vunpack.c.l.b16 %v421
        %v892 = vunpack.c.h.b16 %v421
        %v893 = vunpack.c.l.b16 %v422
        %v894 = vunpack.c.h.b16 %v422
        %v895 = vunpack.c.l.b16 %v423
        %v896 = vunpack.c.h.b16 %v423
        %v897 = vunpack.c.l.b16 %v424
        %v898 = vunpack.c.h.b16 %v424
        %v899 = vunpack.c.l.b16 %v425
        %v900 = vunpack.c.h.b16 %v425
        %v901 = vunpack.c.l.b16 %v426
        %v902 = vunpack.c.h.b16 %v426
        %v903 = vunpack.c.l.b16 %v427
        %v904 = vunpack.c.h.b16 %v427
        %v905 = vunpack.c.l.b16 %v428
        %v906 = vunpack.c.h.b16 %v428
        %v907 = vunpack.c.l.b16 %v429
        %v908 = vunpack.c.h.b16 %v429
        %v909 = vunpack.c.l.b16 %v430
        %v910 = vunpack.c.h.b16 %v430
        %v911 = vunpack.c.l.b16 %v431
        %v912 = vunpack.c.h.b16 %v431
        %v913 = vunpack.c.l.b16 %v432
        %v914 = vunpack.c.h.b16 %v432
        %v915 = vunpack.c.l.b16 %v433
        %v916 = vunpack.c.h.b16 %v433
        %v917 = vunpack.c.l.b16 %v434
        %v918 = vunpack.c.h.b16 %v434
        %v919 = vunpack.c.l.b16 %v435
        %v920 = vunpack.c.h.b16 %v435
        %v921 = vunpack.c.l.b16 %v436
        %v922 = vunpack.c.h.b16 %v436
        %v923 = vunpack.c.l.b16 %v437
        %v924 = vunpack.c.h.b16 %v437
        %v925 = vunpack.c.l.b16 %v438
        %v926 = vunpack.c.h.b16 %v438
        %v927 = vunpack.c.l.b16 %v439
        %v928 = vunpack.c.h.b16 %v439
        %v929 = vunpack.c.l.b16 %v440
        %v930 = vunpack.c.h.b16 %v440
        %v931 = vunpack.c.l.b16 %v441
        %v932 = vunpack.c.h.b16 %v441
        %v933 = vunpack.c.l.b16 %v442
        %v934 = vunpack.c.h.b16 %v442
        %v935 = vunpack.c.l.b16 %v443
        %v936 = vunpack.c.h.b16 %v443
        %v937 = vunpack.c.l.b16 %v444
        %v938 = vunpack.c.h.b16 %v444
        %v939 = vunpack.c.l.b16 %v445
        %v940 = vunpack.c.h.b16 %v445
        %v941 = vunpack.c.l.b16 %v446
        %v942 = vunpack.c.h.b16 %v446
        %v943 = vunpack.c.l.b16 %v447
        %v944 = vunpack.c.h.b16 %v447
        %v945 = vunpack.c.l.b16 %v448
        %v946 = vunpack.c.h.b16 %v448
        %v947 = vunpack.c.l.b16 %v449
        %v948 = vunpack.c.h.b16 %v449
        %v949 = vunpack.c.l.b16 %v450
        %v950 = vunpack.c.h.b16 %v450
        %v951 = vunpack.c.l.b16 %v451
        %v952 = vunpack.c.h.b16 %v451
        %v953 = vunpack.c.l.b16 %v452
        %v954 = vunpack.c.h.b16 %v452
        %v955 = vunpack.c.l.b16 %v453
        %v956 = vunpack.c.h.b16 %v453
        %v957 = vunpack.c.l.b16 %v454
        %v958 = vunpack.c.h.b16 %v454
        %v959 = vunpack.c.l.b16 %v455
        %v960 = vunpack.c.h.b16 %v455
        %v961 = vunpack.c.l.b16 %v456
        %v962 = vunpack.c.h.b16 %v456
        %v963 = vunpack.c.l.b16 %v457
        %v964 = vunpack.c.h.b16 %v457
        %v965 = vunpack.c.l.b16 %v458
        %v966 = vunpack.c.h.b16 %v458
        %v967 = vunpack.c.l.b16 %v459
        %v968 = vunpack.c.h.b16 %v459
        %v969 = vunpack.c.l.b16 %v460
        %v970 = vunpack.c.h.b16 %v460
        %v971 = vunpack.c.l.b16 %v461
        %v972 = vunpack.c.h.b16 %v461
        %v973 = vunpack.c.l.b16 %v462
        %v974 = vunpack.c.h.b16 %v462
        %v975 = vunpack.c.l.b16 %v463
        %v976 = vunpack.c.h.b16 %v463
        %v977 = vunpack.c.l.b16 %v464
        %v978 = vunpack.c.h.b16 %v464
        %v979 = vunpack.c.l.b16 %v465
        %v980 = vunpack.c.h.b16 %v465
        %v981 = vunpack.c.l.b16 %v466
        %v982 = vunpack.c.h.b16 %v466
        %v983 = vunpack.c.l.b16 %v467
        %v984 = vunpack.c.h.b16 %v467
        %v985 = vunpack.c.l.b16 %v468
        %v986 = vunpack.c.h.b16 %v468
        %v987 = vunpack.c.l.b16 %v469
        %v988 = vunpack.c.h.b16 %v469
        %v989 = vunpack.c.l.b16 %v470
        %v990 = vunpack.c.h.b16 %v470
        %v991 = vunpack.c.l.b16 %v471
        %v992 = vunpack.c.h.b16 %v471
        %v993 = vunpack.c.l.b16 %v472
        %v994 = vunpack.c.h.b16 %v472
        %v995 = vunpack.c.l.b16 %v473
        %v996 = vunpack.c.h.b16 %v473
        %v997 = vunpack.c.l.b16 %v474
        %v998 = vunpack.c.h.b16 %v474
        %v999 = vunpack.c.l.b16 %v475
        %v1000 = vunpack.c.h.b16 %v475
        %v1001 = vunpack.c.l.b16 %v476
        %v1002 = vunpack.c.h.b16 %v476
        %v1003 = vunpack.c.l.b16 %v477
        %v1004 = vunpack.c.h.b16 %v477
        %v1005 = vunpack.c.l.b16 %v478
        %v1006 = vunpack.c.h.b16 %v478
        %v1007 = vunpack.c.l.b16 %v479
        %v1008 = vunpack.c.h.b16 %v479
        %v1009 = vunpack.c.l.b16 %v480
        %v1010 = vunpack.c.h.b16 %v480
        %v1011 = vunpack.c.l.b16 %v481
        %v1012 = vunpack.c.h.b16 %v481
        %v1013 = vunpack.c.l.b16 %v482
        %v1014 = vunpack.c.h.b16 %v482
        %v1015 = vunpack.c.l.b16 %v483
        %v1016 = vunpack.c.h.b16 %v483
        %v1017 = vunpack.c.l.b16 %v484
        %v1018 = vunpack.c.h.b16 %v484
        %v1019 = vunpack.c.l.b16 %v485
        %v1020 = vunpack.c.h.b16 %v485
        %v1021 = vunpack.c.l.b16 %v486
        %v1022 = vunpack.c.h.b16 %v486
        %v1023 = vunpack.c.l.b16 %v487
        %v1024 = vunpack.c.h.b16 %v487
        %v1025 = vunpack.c.l.b16 %v488
        %v1026 = vunpack.c.h.b16 %v488
        %v1027 = vunpack.c.l.b16 %v489
        %v1028 = vunpack.c.h.b16 %v489
        %v1029 = vunpack.c.l.b16 %v490
        %v1030 = vunpack.c.h.b16 %v490
        %v1031 = vunpack.c.l.b16 %v491
        %v1032 = vunpack.c.h.b16 %v491
        %v1033 = vunpack.c.l.b16 %v492
        %v1034 = vunpack.c.h.b16 %v492
        %v1035 = vunpack.c.l.b16 %v493
        %v1036 = vunpack.c.h.b16 %v493
        %v1037 = vunpack.c.l.b16 %v494
        %v1038 = vunpack.c.h.b16 %v494
        %v1039 = vunpack.c.l.b16 %v495
        %v1040 = vunpack.c.h.b16 %v495
        %v1041 = vunpack.c.l.b16 %v496
        %v1042 = vunpack.c.h.b16 %v496
        %v1043 = vunpack.c.l.b16 %v497
        %v1044 = vunpack.c.h.b16 %v497
        %v1045 = vunpack.c.l.b16 %v498
        %v1046 = vunpack.c.h.b16 %v498
        %v1047 = vunpack.c.l.b16 %v499
        %v1048 = vunpack.c.h.b16 %v499
        %v1049 = vunpack.c.l.b16 %v500
        %v1050 = vunpack.c.h.b16 %v500
        %v1051 = vunpack.c.l.b16 %v501
        %v1052 = vunpack.c.h.b16 %v501
        %v1053 = vunpack.c.l.b16 %v502
        %v1054 = vunpack.c.h.b16 %v502
        %v1055 = vunpack.c.l.b16 %v503
        %v1056 = vunpack.c.h.b16 %v503
        %v1057 = vunpack.c.l.b16 %v504
        %v1058 = vunpack.c.h.b16 %v504
        %v1059 = vunpack.c.l.b16 %v505
        %v1060 = vunpack.c.h.b16 %v505
        %v1061 = vunpack.c.l.b16 %v506
        %v1062 = vunpack.c.h.b16 %v506
        %v1063 = vunpack.c.l.b16 %v507
        %v1064 = vunpack.c.h.b16 %v507
        %v1065 = vunpack.c.l.b16 %v508
        %v1066 = vunpack.c.h.b16 %v508
        %v1067 = vunpack.c.l.b16 %v509
        %v1068 = vunpack.c.h.b16 %v509
        %v1069 = vunpack.c.l.b16 %v510
        %v1070 = vunpack.c.h.b16 %v510
        %v1071 = vunpack.c.l.b16 %v511
        %v1072 = vunpack.c.h.b16 %v511
        %v1073 = vunpack.c.l.b16 %v512
        %v1074 = vunpack.c.h.b16 %v512
        %v1075 = vunpack.c.l.b16 %v513
        %v1076 = vunpack.c.h.b16 %v513
        %v1077 = vunpack.c.l.b16 %v514
        %v1078 = vunpack.c.h.b16 %v514
        %v1079 = vunpack.c.l.b16 %v515
        %v1080 = vunpack.c.h.b16 %v515
        %v1081 = vunpack.c.l.b16 %v516
        %v1082 = vunpack.c.h.b16 %v516
        %v1083 = vunpack.c.l.b16 %v517
        %v1084 = vunpack.c.h.b16 %v517
        %v1085 = vunpack.c.l.b16 %v518
        %v1086 = vunpack.c.h.b16 %v518
        %v1087 = vunpack.c.l.b16 %v519
        %v1088 = vunpack.c.h.b16 %v519
        %v1089 = vunpack.c.l.b16 %v520
        %v1090 = vunpack.c.h.b16 %v520
        %v1091 = vunpack.c.l.b16 %v521
        %v1092 = vunpack.c.h.b16 %v521
        %v1093 = vunpack.c.l.b16 %v522
        %v1094 = vunpack.c.h.b16 %v522
        %v1095 = vunpack.c.l.b16 %v523
        %v1096 = vunpack.c.h.b16 %v523
        %v1097 = vunpack.c.l.b16 %v524
        %v1098 = vunpack.c.h.b16 %v524
        %v1099 = vunpack.c.l.b16 %v525
        %v1100 = vunpack.c.h.b16 %v525
        %v1101 = vunpack.c.l.b16 %v526
        %v1102 = vunpack.c.h.b16 %v526
        %v1103 = vunpack.c.l.b16 %v527
        %v1104 = vunpack.c.h.b16 %v527
        %v1105 = vunpack.c.l.b16 %v528
        %v1106 = vunpack.c.h.b16 %v528
        %v1107 = vunpack.c.l.b16 %v529
        %v1108 = vunpack.c.h.b16 %v529
        %v1109 = vunpack.c.l.b16 %v530
        %v1110 = vunpack.c.h.b16 %v530
        %v1111 = vunpack.c.l.b16 %v531
        %v1112 = vunpack.c.h.b16 %v531
        %v1113 = vunpack.c.l.b16 %v532
        %v1114 = vunpack.c.h.b16 %v532
        %v1115 = vunpack.c.l.b16 %v533
        %v1116 = vunpack.c.h.b16 %v533
        %v1117 = vunpack.c.l.b16 %v534
        %v1118 = vunpack.c.h.b16 %v534
        %v1119 = vunpack.c.l.b16 %v535
        %v1120 = vunpack.c.h.b16 %v535
        %v1121 = vunpack.c.l.b16 %v536
        %v1122 = vunpack.c.h.b16 %v536
        %v1123 = vunpack.c.l.b16 %v537
        %v1124 = vunpack.c.h.b16 %v537
        %v1125 = vunpack.c.l.b16 %v538
        %v1126 = vunpack.c.h.b16 %v538
        %v1127 = vunpack.c.l.b16 %v539
        %v1128 = vunpack.c.h.b16 %v539
        %v1129 = vunpack.c.l.b16 %v540
        %v1130 = vunpack.c.h.b16 %v540
        %v1131 = vunpack.c.l.b16 %v541
        %v1132 = vunpack.c.h.b16 %v541
        %v1133 = vunpack.c.l.b16 %v542
        %v1134 = vunpack.c.h.b16 %v542
        %v1135 = vunpack.c.l.b16 %v543
        %v1136 = vunpack.c.h.b16 %v543
        %v1137 = vunpack.c.l.b16 %v544
        %v1138 = vunpack.c.h.b16 %v544
        %v1139 = vunpack.c.l.b16 %v545
        %v1140 = vunpack.c.h.b16 %v545
        %v1141 = vunpack.c.l.b16 %v546
        %v1142 = vunpack.c.h.b16 %v546
        %v1143 = vunpack.c.l.b16 %v547
        %v1144 = vunpack.c.h.b16 %v547
        %v1145 = vunpack.c.l.b16 %v548
        %v1146 = vunpack.c.h.b16 %v548
        %v1147 = vunpack.c.l.b16 %v549
        %v1148 = vunpack.c.h.b16 %v549
        %v1149 = vunpack.c.l.b16 %v550
        %v1150 = vunpack.c.h.b16 %v550
        %v1151 = vunpack.c.l.b16 %v551
        %v1152 = vunpack.c.h.b16 %v551
        %v1153 = vunpack.c.l.b16 %v552
        %v1154 = vunpack.c.h.b16 %v552
        %v1155 = vunpack.c.l.b16 %v553
        %v1156 = vunpack.c.h.b16 %v553
        %v1157 = vunpack.c.l.b16 %v554
        %v1158 = vunpack.c.h.b16 %v554
        %v1159 = vunpack.c.l.b16 %v555
        %v1160 = vunpack.c.h.b16 %v555
        %v1161 = vunpack.c.l.b16 %v556
        %v1162 = vunpack.c.h.b16 %v556
        %v1163 = vunpack.c.l.b16 %v557
        %v1164 = vunpack.c.h.b16 %v557
        %v1165 = vunpack.c.l.b16 %v558
        %v1166 = vunpack.c.h.b16 %v558
        %v1167 = vunpack.c.l.b16 %v559
        %v1168 = vunpack.c.h.b16 %v559
        %v1169 = vunpack.c.l.b16 %v560
        %v1170 = vunpack.c.h.b16 %v560
        %v1171 = vunpack.c.l.b16 %v561
        %v1172 = vunpack.c.h.b16 %v561
        %v1173 = vunpack.c.l.b16 %v562
        %v1174 = vunpack.c.h.b16 %v562
        %v1175 = vunpack.c.l.b16 %v563
        %v1176 = vunpack.c.h.b16 %v563
        %v1177 = vunpack.c.l.b16 %v564
        %v1178 = vunpack.c.h.b16 %v564
        %v1179 = vunpack.c.l.b16 %v565
        %v1180 = vunpack.c.h.b16 %v565
        %v1181 = vunpack.c.l.b16 %v566
        %v1182 = vunpack.c.h.b16 %v566
        %v1183 = vunpack.c.l.b16 %v567
        %v1184 = vunpack.c.h.b16 %v567
        %v1185 = vunpack.c.l.b16 %v568
        %v1186 = vunpack.c.h.b16 %v568
        %v1187 = vunpack.c.l.b16 %v569
        %v1188 = vunpack.c.h.b16 %v569
        %v1189 = vunpack.c.l.b16 %v570
        %v1190 = vunpack.c.h.b16 %v570
        %v1191 = vunpack.c.l.b16 %v571
        %v1192 = vunpack.c.h.b16 %v571
        %v1193 = vunpack.c.l.b16 %v572
        %v1194 = vunpack.c.h.b16 %v572
        %v1195 = vunpack.c.l.b16 %v573
        %v1196 = vunpack.c.h.b16 %v573
        %v1197 = vunpack.c.l.b16 %v574
        %v1198 = vunpack.c.h.b16 %v574
        %v1199 = vunpack.c.l.b16 %v575
        %v1200 = vunpack.c.h.b16 %v575
        %v1201 = vunpack.c.l.b16 %v576
        %v1202 = vunpack.c.h.b16 %v576
        %v1203 = vunpack.c.l.b16 %v577
        %v1204 = vunpack.c.h.b16 %v577
        %v1205 = vunpack.c.l.b16 %v578
        %v1206 = vunpack.c.h.b16 %v578
        %v1207 = vpack.c.b16 %v827, %v823
        %v1208 = vpack.c.b16 %v828, %v824
        %v1209 = vpack.c.b16 %v829, %v825
        %v1210 = vpack.c.b16 %v830, %v826
        %v1211 = vpack.c.b16 %v835, %v831
        %v1212 = vpack.c.b16 %v836, %v832
        %v1213 = vpack.c.b16 %v837, %v833
        %v1214 = vpack.c.b16 %v838, %v834
        %v1215 = vpack.c.b16 %v843, %v839
        %v1216 = vpack.c.b16 %v844, %v840
        %v1217 = vpack.c.b16 %v845, %v841
        %v1218 = vpack.c.b16 %v846, %v842
        %v1219 = vpack.c.b16 %v851, %v847
        %v1220 = vpack.c.b16 %v852, %v848
        %v1221 = vpack.c.b16 %v853, %v849
        %v1222 = vpack.c.b16 %v854, %v850
        %v1223 = vpack.c.b16 %v859, %v855
        %v1224 = vpack.c.b16 %v860, %v856
        %v1225 = vpack.c.b16 %v861, %v857
        %v1226 = vpack.c.b16 %v862, %v858
        %v1227 = vpack.c.b16 %v867, %v863
        %v1228 = vpack.c.b16 %v868, %v864
        %v1229 = vpack.c.b16 %v869, %v865
        %v1230 = vpack.c.b16 %v870, %v866
        %v1231 = vpack.c.b16 %v875, %v871
        %v1232 = vpack.c.b16 %v876, %v872
        %v1233 = vpack.c.b16 %v877, %v873
        %v1234 = vpack.c.b16 %v878, %v874
        %v1235 = vpack.c.b16 %v883, %v879
        %v1236 = vpack.c.b16 %v884, %v880
        %v1237 = vpack.c.b16 %v885, %v881
        %v1238 = vpack.c.b16 %v886, %v882
        %v1239 = vpack.c.b16 %v891, %v887
        %v1240 = vpack.c.b16 %v892, %v888
        %v1241 = vpack.c.b16 %v893, %v889
        %v1242 = vpack.c.b16 %v894, %v890
        %v1243 = vpack.c.b16 %v899, %v895
        %v1244 = vpack.c.b16 %v900, %v896
        %v1245 = vpack.c.b16 %v901, %v897
        %v1246 = vpack.c.b16 %v902, %v898
        %v1247 = vpack.c.b16 %v907, %v903
        %v1248 = vpack.c.b16 %v908, %v904
        %v1249 = vpack.c.b16 %v909, %v905
        %v1250 = vpack.c.b16 %v910, %v906
        %v1251 = vpack.c.b16 %v915, %v911
        %v1252 = vpack.c.b16 %v916, %v912
        %v1253 = vpack.c.b16 %v917, %v913
        %v1254 = vpack.c.b16 %v918, %v914
        %v1255 = vpack.c.b16 %v923, %v919
        %v1256 = vpack.c.b16 %v924, %v920
        %v1257 = vpack.c.b16 %v925, %v921
        %v1258 = vpack.c.b16 %v926, %v922
        %v1259 = vpack.c.b16 %v931, %v927
        %v1260 = vpack.c.b16 %v932, %v928
        %v1261 = vpack.c.b16 %v933, %v929
        %v1262 = vpack.c.b16 %v934, %v930
        %v1263 = vpack.c.b16 %v939, %v935
        %v1264 = vpack.c.b16 %v940, %v936
        %v1265 = vpack.c.b16 %v941, %v937
        %v1266 = vpack.c.b16 %v942, %v938
        %v1267 = vpack.c.b16 %v947, %v943
        %v1268 = vpack.c.b16 %v948, %v944
        %v1269 = vpack.c.b16 %v949, %v945
        %v1270 = vpack.c.b16 %v950, %v946
        %v1271 = vpack.c.b16 %v955, %v951
        %v1272 = vpack.c.b16 %v956, %v952
        %v1273 = vpack.c.b16 %v957, %v953
        %v1274 = vpack.c.b16 %v958, %v954
        %v1275 = vpack.c.b16 %v963, %v959
        %v1276 = vpack.c.b16 %v964, %v960
        %v1277 = vpack.c.b16 %v965, %v961
        %v1278 = vpack.c.b16 %v966, %v962
        %v1279 = vpack.c.b16 %v971, %v967
        %v1280 = vpack.c.b16 %v972, %v968
        %v1281 = vpack.c.b16 %v973, %v969
        %v1282 = vpack.c.b16 %v974, %v970
        %v1283 = vpack.c.b16 %v979, %v975
        %v1284 = vpack.c.b16 %v980, %v976
        %v1285 = vpack.c.b16 %v981, %v977
        %v1286 = vpack.c.b16 %v982, %v978
        %v1287 = vpack.c.b16 %v987, %v983
        %v1288 = vpack.c.b16 %v988, %v984
        %v1289 = vpack.c.b16 %v989, %v985
        %v1290 = vpack.c.b16 %v990, %v986
        %v1291 = vpack.c.b16 %v995, %v991
        %v1292 = vpack.c.b16 %v996, %v992
        %v1293 = vpack.c.b16 %v997, %v993
        %v1294 = vpack.c.b16 %v998, %v994
        %v1295 = vpack.c.b16 %v1003, %v999
        %v1296 = vpack.c.b16 %v1004, %v1000
        %v1297 = vpack.c.b16 %v1005, %v1001
        %v1298 = vpack.c.b16 %v1006, %v1002
        %v1299 = vpack.c.b16 %v1011, %v1007
        %v1300 = vpack.c.b16 %v1012, %v1008
        %v1301 = vpack.c.b16 %v1013, %v1009
        %v1302 = vpack.c.b16 %v1014, %v1010
        %v1303 = vpack.c.b16 %v1019, %v1015
        %v1304 = vpack.c.b16 %v1020, %v1016
        %v1305 = vpack.c.b16 %v1021, %v1017
        %v1306 = vpack.c.b16 %v1022, %v1018
        %v1307 = vpack.c.b16 %v1027, %v1023
        %v1308 = vpack.c.b16 %v1028, %v1024
        %v1309 = vpack.c.b16 %v1029, %v1025
        %v1310 = vpack.c.b16 %v1030, %v1026
        %v1311 = vpack.c.b16 %v1035, %v1031
        %v1312 = vpack.c.b16 %v1036, %v1032
        %v1313 = vpack.c.b16 %v1037, %v1033
        %v1314 = vpack.c.b16 %v1038, %v1034
        %v1315 = vpack.c.b16 %v1043, %v1039
        %v1316 = vpack.c.b16 %v1044, %v1040
        %v1317 = vpack.c.b16 %v1045, %v1041
        %v1318 = vpack.c.b16 %v1046, %v1042
        %v1319 = vpack.c.b16 %v1051, %v1047
        %v1320 = vpack.c.b16 %v1052, %v1048
        %v1321 = vpack.c.b16 %v1053, %v1049
        %v1322 = vpack.c.b16 %v1054, %v1050
        %v1323 = vpack.c.b16 %v1059, %v1055
        %v1324 = vpack.c.b16 %v1060, %v1056
        %v1325 = vpack.c.b16 %v1061, %v1057
        %v1326 = vpack.c.b16 %v1062, %v1058
        %v1327 = vpack.c.b16 %v1067, %v1063
        %v1328 = vpack.c.b16 %v1068, %v1064
        %v1329 = vpack.c.b16 %v1069, %v1065
        %v1330 = vpack.c.b16 %v1070, %v1066
        %v1331 = vpack.c.b16 %v1075, %v1071
        %v1332 = vpack.c.b16 %v1076, %v1072
        %v1333 = vpack.c.b16 %v1077, %v1073
        %v1334 = vpack.c.b16 %v1078, %v1074
        %v1335 = vpack.c.b16 %v1083, %v1079
        %v1336 = vpack.c.b16 %v1084, %v1080
        %v1337 = vpack.c.b16 %v1085, %v1081
        %v1338 = vpack.c.b16 %v1086, %v1082
        %v1339 = vpack.c.b16 %v1091, %v1087
        %v1340 = vpack.c.b16 %v1092, %v1088
        %v1341 = vpack.c.b16 %v1093, %v1089
        %v1342 = vpack.c.b16 %v1094, %v1090
        %v1343 = vpack.c.b16 %v1099, %v1095
        %v1344 = vpack.c.b16 %v1100, %v1096
        %v1345 = vpack.c.b16 %v1101, %v1097
        %v1346 = vpack.c.b16 %v1102, %v1098
        %v1347 = vpack.c.b16 %v1107, %v1103
        %v1348 = vpack.c.b16 %v1108, %v1104
        %v1349 = vpack.c.b16 %v1109, %v1105
        %v1350 = vpack.c.b16 %v1110, %v1106
        %v1351 = vpack.c.b16 %v1115, %v1111
        %v1352 = vpack.c.b16 %v1116, %v1112
        %v1353 = vpack.c.b16 %v1117, %v1113
        %v1354 = vpack.c.b16 %v1118, %v1114
        %v1355 = vpack.c.b16 %v1123, %v1119
        %v1356 = vpack.c.b16 %v1124, %v1120
        %v1357 = vpack.c.b16 %v1125, %v1121
        %v1358 = vpack.c.b16 %v1126, %v1122
        %v1359 = vpack.c.b16 %v1131, %v1127
        %v1360 = vpack.c.b16 %v1132, %v1128
        %v1361 = vpack.c.b16 %v1133, %v1129
        %v1362 = vpack.c.b16 %v1134, %v1130
        %v1363 = vpack.c.b16 %v1139, %v1135
        %v1364 = vpack.c.b16 %v1140, %v1136
        %v1365 = vpack.c.b16 %v1141, %v1137
        %v1366 = vpack.c.b16 %v1142, %v1138
        %v1367 = vpack.c.b16 %v1147, %v1143
        %v1368 = vpack.c.b16 %v1148, %v1144
        %v1369 = vpack.c.b16 %v1149, %v1145
        %v1370 = vpack.c.b16 %v1150, %v1146
        %v1371 = vpack.c.b16 %v1155, %v1151
        %v1372 = vpack.c.b16 %v1156, %v1152
        %v1373 = vpack.c.b16 %v1157, %v1153
        %v1374 = vpack.c.b16 %v1158, %v1154
        %v1375 = vpack.c.b16 %v1163, %v1159
        %v1376 = vpack.c.b16 %v1164, %v1160
        %v1377 = vpack.c.b16 %v1165, %v1161
        %v1378 = vpack.c.b16 %v1166, %v1162
        %v1379 = vpack.c.b16 %v1171, %v1167
        %v1380 = vpack.c.b16 %v1172, %v1168
        %v1381 = vpack.c.b16 %v1173, %v1169
        %v1382 = vpack.c.b16 %v1174, %v1170
        %v1383 = vpack.c.b16 %v1179, %v1175
        %v1384 = vpack.c.b16 %v1180, %v1176
        %v1385 = vpack.c.b16 %v1181, %v1177
        %v1386 = vpack.c.b16 %v1182, %v1178
        %v1387 = vpack.c.b16 %v1187, %v1183
        %v1388 = vpack.c.b16 %v1188, %v1184
        %v1389 = vpack.c.b16 %v1189, %v1185
        %v1390 = vpack.c.b16 %v1190, %v1186
        %v1391 = vpack.c.b16 %v1195, %v1191
        %v1392 = vpack.c.b16 %v1196, %v1192
        %v1393 = vpack.c.b16 %v1197, %v1193
        %v1394 = vpack.c.b16 %v1198, %v1194
        %v1395 = vpack.c.b16 %v1203, %v1199
        %v1396 = vpack.c.b16 %v1204, %v1200
        %v1397 = vpack.c.b16 %v1205, %v1201
        %v1398 = vpack.c.b16 %v1206, %v1202
        %1591 = vmatprep.subr.bf16.mxu0 %v1208
        %1592 = vmatpush1.bf16.msra.mxu0 %v1207
        %1593 = vmatprep.subr.bf16.mxu0 %v1212
        %1594 = vmatpush1.bf16.msra.mxu0 %v1211
        %1595 = vmatprep.subr.bf16.mxu0 %v1216
        %1596 = vmatpush1.bf16.msra.mxu0 %v1215
        %1597 = vmatprep.subr.bf16.mxu0 %v1220
        %1598 = vmatpush1.bf16.msra.mxu0 %v1219
        %1599 = vmatprep.subr.bf16.mxu0 %v1224
        %1600 = vmatpush1.bf16.msra.mxu0 %v1223
        %1601 = vmatprep.subr.bf16.mxu0 %v1228
        %1602 = vmatpush1.bf16.msra.mxu0 %v1227
        %1603 = vmatprep.subr.bf16.mxu0 %v1232
        %1604 = vmatpush1.bf16.msra.mxu0 %v1231
        %1605 = vmatprep.subr.bf16.mxu0 %v1236
        %1606 = vmatpush1.bf16.msra.mxu0 %v1235
        %1607 = vmatprep.subr.bf16.mxu0 %v1240
        %1608 = vmatpush1.bf16.msra.mxu0 %v1239
        %1609 = vmatprep.subr.bf16.mxu0 %v1244
        %1610 = vmatpush1.bf16.msra.mxu0 %v1243
        %1611 = vmatprep.subr.bf16.mxu0 %v1248
        %1612 = vmatpush1.bf16.msra.mxu0 %v1247
        %1613 = vmatprep.subr.bf16.mxu0 %v1252
        %1614 = vmatpush1.bf16.msra.mxu0 %v1251
        %1615 = vmatprep.subr.bf16.mxu0 %v1256
        %1616 = vmatpush1.bf16.msra.mxu0 %v1255
        %1617 = vmatprep.subr.bf16.mxu0 %v1260
        %1618 = vmatpush1.bf16.msra.mxu0 %v1259
        %1619 = vmatprep.subr.bf16.mxu0 %v1264
        %1620 = vmatpush1.bf16.msra.mxu0 %v1263
        %1621 = vmatprep.subr.bf16.mxu0 %v1268
        %1622 = vmatpush1.bf16.msra.mxu0 %v1267
        %1623 = vmatprep.mubr.bf16.mxu0 %v620
        %1624 = vmatmul.mubr.bf16.gmra.mrb[0].mxu0 %v619
        %v1625 = vpop.f32.mrb[0].mxu0
        %v1626 = vadd.f32 %v584, %v1625
        %v1627 = vpop.f32.mrb[0].mxu0
        %v1628 = vadd.f32 %v588, %v1627
        %v1629 = vpop.f32.mrb[0].mxu0
        %v1630 = vadd.f32 %v584, %v1629
        %v1631 = vpop.f32.mrb[0].mxu0
        %v1632 = vadd.f32 %v588, %v1631
        %1633 = vdwg.mxu0
        %1634 = vmatprep.subr.bf16.mxu0 %v1272
        %1635 = vmatpush1.bf16.msra.mxu0 %v1271
        %1636 = vmatprep.subr.bf16.mxu0 %v1276
        %1637 = vmatpush1.bf16.msra.mxu0 %v1275
        %1638 = vmatprep.subr.bf16.mxu0 %v1280
        %1639 = vmatpush1.bf16.msra.mxu0 %v1279
        %1640 = vmatprep.subr.bf16.mxu0 %v1284
        %1641 = vmatpush1.bf16.msra.mxu0 %v1283
        %1642 = vmatprep.subr.bf16.mxu0 %v1288
        %1643 = vmatpush1.bf16.msra.mxu0 %v1287
        %1644 = vmatprep.subr.bf16.mxu0 %v1292
        %1645 = vmatpush1.bf16.msra.mxu0 %v1291
        %1646 = vmatprep.subr.bf16.mxu0 %v1296
        %1647 = vmatpush1.bf16.msra.mxu0 %v1295
        %1648 = vmatprep.subr.bf16.mxu0 %v1300
        %1649 = vmatpush1.bf16.msra.mxu0 %v1299
        %1650 = vmatprep.subr.bf16.mxu0 %v1304
        %1651 = vmatpush1.bf16.msra.mxu0 %v1303
        %1652 = vmatprep.subr.bf16.mxu0 %v1308
        %1653 = vmatpush1.bf16.msra.mxu0 %v1307
        %1654 = vmatprep.subr.bf16.mxu0 %v1312
        %1655 = vmatpush1.bf16.msra.mxu0 %v1311
        %1656 = vmatprep.subr.bf16.mxu0 %v1316
        %1657 = vmatpush1.bf16.msra.mxu0 %v1315
        %1658 = vmatprep.subr.bf16.mxu0 %v1320
        %1659 = vmatpush1.bf16.msra.mxu0 %v1319
        %1660 = vmatprep.subr.bf16.mxu0 %v1324
        %1661 = vmatpush1.bf16.msra.mxu0 %v1323
        %1662 = vmatprep.subr.bf16.mxu0 %v1328
        %1663 = vmatpush1.bf16.msra.mxu0 %v1327
        %1664 = vmatprep.subr.bf16.mxu0 %v1332
        %1665 = vmatpush1.bf16.msra.mxu0 %v1331
        %1666 = vmatprep.mubr.bf16.mxu0 %v622
        %1667 = vmatmul.mubr.bf16.gmra.mrb[0].mxu0 %v621
        %v1668 = vpop.f32.mrb[0].mxu0
        %v1669 = vadd.f32 %v1626, %v1668
        %v1670 = vpop.f32.mrb[0].mxu0
        %v1671 = vadd.f32 %v1628, %v1670
        %v1672 = vpop.f32.mrb[0].mxu0
        %v1673 = vadd.f32 %v1630, %v1672
        %v1674 = vpop.f32.mrb[0].mxu0
        %v1675 = vadd.f32 %v1632, %v1674
        %1676 = vdwg.mxu0
        %1677 = vmatprep.subr.bf16.mxu0 %v1336
        %1678 = vmatpush1.bf16.msra.mxu0 %v1335
        %1679 = vmatprep.subr.bf16.mxu0 %v1340
        %1680 = vmatpush1.bf16.msra.mxu0 %v1339
        %1681 = vmatprep.subr.bf16.mxu0 %v1344
        %1682 = vmatpush1.bf16.msra.mxu0 %v1343
        %1683 = vmatprep.subr.bf16.mxu0 %v1348
        %1684 = vmatpush1.bf16.msra.mxu0 %v1347
        %1685 = vmatprep.subr.bf16.mxu0 %v1352
        %1686 = vmatpush1.bf16.msra.mxu0 %v1351
        %1687 = vmatprep.subr.bf16.mxu0 %v1356
        %1688 = vmatpush1.bf16.msra.mxu0 %v1355
        %1689 = vmatprep.subr.bf16.mxu0 %v1360
        %1690 = vmatpush1.bf16.msra.mxu0 %v1359
        %1691 = vmatprep.subr.bf16.mxu0 %v1364
        %1692 = vmatpush1.bf16.msra.mxu0 %v1363
        %1693 = vmatprep.subr.bf16.mxu0 %v1368
        %1694 = vmatpush1.bf16.msra.mxu0 %v1367
        %1695 = vmatprep.subr.bf16.mxu0 %v1372
        %1696 = vmatpush1.bf16.msra.mxu0 %v1371
        %1697 = vmatprep.subr.bf16.mxu0 %v1376
        %1698 = vmatpush1.bf16.msra.mxu0 %v1375
        %1699 = vmatprep.subr.bf16.mxu0 %v1380
        %1700 = vmatpush1.bf16.msra.mxu0 %v1379
        %1701 = vmatprep.subr.bf16.mxu0 %v1384
        %1702 = vmatpush1.bf16.msra.mxu0 %v1383
        %1703 = vmatprep.subr.bf16.mxu0 %v1388
        %1704 = vmatpush1.bf16.msra.mxu0 %v1387
        %1705 = vmatprep.subr.bf16.mxu0 %v1392
        %1706 = vmatpush1.bf16.msra.mxu0 %v1391
        %1707 = vmatprep.subr.bf16.mxu0 %v1396
        %1708 = vmatpush1.bf16.msra.mxu0 %v1395
        %1709 = vmatprep.mubr.bf16.mxu0 %v624
        %1710 = vmatmul.mubr.bf16.gmra.mrb[0].mxu0 %v623
        %v1711 = vpop.f32.mrb[0].mxu0
        %v1712 = vadd.f32 %v1669, %v1711
        %v1713 = vpop.f32.mrb[0].mxu0
        %v1714 = vadd.f32 %v1671, %v1713
        %v1715 = vpop.f32.mrb[0].mxu0
        %v1716 = vadd.f32 %v1673, %v1715
        %v1717 = vpop.f32.mrb[0].mxu0
        %v1718 = vadd.f32 %v1675, %v1717
        %1719 = vdwg.mxu0
        %1720 = vmatprep.subr.bf16.mxu0 %v1210
        %1721 = vmatpush1.bf16.msra.mxu0 %v1209
        %1722 = vmatprep.subr.bf16.mxu0 %v1214
        %1723 = vmatpush1.bf16.msra.mxu0 %v1213
        %1724 = vmatprep.subr.bf16.mxu0 %v1218
        %1725 = vmatpush1.bf16.msra.mxu0 %v1217
        %1726 = vmatprep.subr.bf16.mxu0 %v1222
        %1727 = vmatpush1.bf16.msra.mxu0 %v1221
        %1728 = vmatprep.subr.bf16.mxu0 %v1226
        %1729 = vmatpush1.bf16.msra.mxu0 %v1225
        %1730 = vmatprep.subr.bf16.mxu0 %v1230
        %1731 = vmatpush1.bf16.msra.mxu0 %v1229
        %1732 = vmatprep.subr.bf16.mxu0 %v1234
        %1733 = vmatpush1.bf16.msra.mxu0 %v1233
        %1734 = vmatprep.subr.bf16.mxu0 %v1238
        %1735 = vmatpush1.bf16.msra.mxu0 %v1237
        %1736 = vmatprep.subr.bf16.mxu0 %v1242
        %1737 = vmatpush1.bf16.msra.mxu0 %v1241
        %1738 = vmatprep.subr.bf16.mxu0 %v1246
        %1739 = vmatpush1.bf16.msra.mxu0 %v1245
        %1740 = vmatprep.subr.bf16.mxu0 %v1250
        %1741 = vmatpush1.bf16.msra.mxu0 %v1249
        %1742 = vmatprep.subr.bf16.mxu0 %v1254
        %1743 = vmatpush1.bf16.msra.mxu0 %v1253
        %1744 = vmatprep.subr.bf16.mxu0 %v1258
        %1745 = vmatpush1.bf16.msra.mxu0 %v1257
        %1746 = vmatprep.subr.bf16.mxu0 %v1262
        %1747 = vmatpush1.bf16.msra.mxu0 %v1261
        %1748 = vmatprep.subr.bf16.mxu0 %v1266
        %1749 = vmatpush1.bf16.msra.mxu0 %v1265
        %1750 = vmatprep.subr.bf16.mxu0 %v1270
        %1751 = vmatpush1.bf16.msra.mxu0 %v1269
        %1752 = vmatprep.mubr.bf16.mxu0 %v620
        %1753 = vmatmul.mubr.bf16.gmra.mrb[0].mxu0 %v619
        %v1754 = vpop.f32.mrb[0].mxu0
        %v1755 = vadd.f32 %v592, %v1754
        %v1756 = vpop.f32.mrb[0].mxu0
        %v1757 = vadd.f32 %v596, %v1756
        %v1758 = vpop.f32.mrb[0].mxu0
        %v1759 = vadd.f32 %v592, %v1758
        %v1760 = vpop.f32.mrb[0].mxu0
        %v1761 = vadd.f32 %v596, %v1760
        %1762 = vdwg.mxu0
        %1763 = vmatprep.subr.bf16.mxu0 %v1274
        %1764 = vmatpush1.bf16.msra.mxu0 %v1273
        %1765 = vmatprep.subr.bf16.mxu0 %v1278
        %1766 = vmatpush1.bf16.msra.mxu0 %v1277
        %1767 = vmatprep.subr.bf16.mxu0 %v1282
        %1768 = vmatpush1.bf16.msra.mxu0 %v1281
        %1769 = vmatprep.subr.bf16.mxu0 %v1286
        %1770 = vmatpush1.bf16.msra.mxu0 %v1285
        %1771 = vmatprep.subr.bf16.mxu0 %v1290
        %1772 = vmatpush1.bf16.msra.mxu0 %v1289
        %1773 = vmatprep.subr.bf16.mxu0 %v1294
        %1774 = vmatpush1.bf16.msra.mxu0 %v1293
        %1775 = vmatprep.subr.bf16.mxu0 %v1298
        %1776 = vmatpush1.bf16.msra.mxu0 %v1297
        %1777 = vmatprep.subr.bf16.mxu0 %v1302
        %1778 = vmatpush1.bf16.msra.mxu0 %v1301
        %1779 = vmatprep.subr.bf16.mxu0 %v1306
        %1780 = vmatpush1.bf16.msra.mxu0 %v1305
        %1781 = vmatprep.subr.bf16.mxu0 %v1310
        %1782 = vmatpush1.bf16.msra.mxu0 %v1309
        %1783 = vmatprep.subr.bf16.mxu0 %v1314
        %1784 = vmatpush1.bf16.msra.mxu0 %v1313
        %1785 = vmatprep.subr.bf16.mxu0 %v1318
        %1786 = vmatpush1.bf16.msra.mxu0 %v1317
        %1787 = vmatprep.subr.bf16.mxu0 %v1322
        %1788 = vmatpush1.bf16.msra.mxu0 %v1321
        %1789 = vmatprep.subr.bf16.mxu0 %v1326
        %1790 = vmatpush1.bf16.msra.mxu0 %v1325
        %1791 = vmatprep.subr.bf16.mxu0 %v1330
        %1792 = vmatpush1.bf16.msra.mxu0 %v1329
        %1793 = vmatprep.subr.bf16.mxu0 %v1334
        %1794 = vmatpush1.bf16.msra.mxu0 %v1333
        %1795 = vmatprep.mubr.bf16.mxu0 %v622
        %1796 = vmatmul.mubr.bf16.gmra.mrb[0].mxu0 %v621
        %v1797 = vpop.f32.mrb[0].mxu0
        %v1798 = vadd.f32 %v1755, %v1797
        %v1799 = vpop.f32.mrb[0].mxu0
        %v1800 = vadd.f32 %v1757, %v1799
        %v1801 = vpop.f32.mrb[0].mxu0
        %v1802 = vadd.f32 %v1759, %v1801
        %v1803 = vpop.f32.mrb[0].mxu0
        %v1804 = vadd.f32 %v1761, %v1803
        %1805 = vdwg.mxu0
        %1806 = vmatprep.subr.bf16.mxu0 %v1338
        %1807 = vmatpush1.bf16.msra.mxu0 %v1337
        %1808 = vmatprep.subr.bf16.mxu0 %v1342
        %1809 = vmatpush1.bf16.msra.mxu0 %v1341
        %1810 = vmatprep.subr.bf16.mxu0 %v1346
        %1811 = vmatpush1.bf16.msra.mxu0 %v1345
        %1812 = vmatprep.subr.bf16.mxu0 %v1350
        %1813 = vmatpush1.bf16.msra.mxu0 %v1349
        %1814 = vmatprep.subr.bf16.mxu0 %v1354
        %1815 = vmatpush1.bf16.msra.mxu0 %v1353
        %1816 = vmatprep.subr.bf16.mxu0 %v1358
        %1817 = vmatpush1.bf16.msra.mxu0 %v1357
        %1818 = vmatprep.subr.bf16.mxu0 %v1362
        %1819 = vmatpush1.bf16.msra.mxu0 %v1361
        %1820 = vmatprep.subr.bf16.mxu0 %v1366
        %1821 = vmatpush1.bf16.msra.mxu0 %v1365
        %1822 = vmatprep.subr.bf16.mxu0 %v1370
        %1823 = vmatpush1.bf16.msra.mxu0 %v1369
        %1824 = vmatprep.subr.bf16.mxu0 %v1374
        %1825 = vmatpush1.bf16.msra.mxu0 %v1373
        %1826 = vmatprep.subr.bf16.mxu0 %v1378
        %1827 = vmatpush1.bf16.msra.mxu0 %v1377
        %1828 = vmatprep.subr.bf16.mxu0 %v1382
        %1829 = vmatpush1.bf16.msra.mxu0 %v1381
        %1830 = vmatprep.subr.bf16.mxu0 %v1386
        %1831 = vmatpush1.bf16.msra.mxu0 %v1385
        %1832 = vmatprep.subr.bf16.mxu0 %v1390
        %1833 = vmatpush1.bf16.msra.mxu0 %v1389
        %1834 = vmatprep.subr.bf16.mxu0 %v1394
        %1835 = vmatpush1.bf16.msra.mxu0 %v1393
        %1836 = vmatprep.subr.bf16.mxu0 %v1398
        %1837 = vmatpush1.bf16.msra.mxu0 %v1397
        %1838 = vmatprep.mubr.bf16.mxu0 %v624
        %1839 = vmatmul.mubr.bf16.gmra.mrb[0].mxu0 %v623
        %v1840 = vpop.f32.mrb[0].mxu0
        %v1841 = vadd.f32 %v1798, %v1840
        %v1842 = vpop.f32.mrb[0].mxu0
        %v1843 = vadd.f32 %v1800, %v1842
        %v1844 = vpop.f32.mrb[0].mxu0
        %v1845 = vadd.f32 %v1802, %v1844
        %v1846 = vpop.f32.mrb[0].mxu0
        %v1847 = vadd.f32 %v1804, %v1846
        %1848 = vdwg.mxu0
        %v1849 = vmul.f32 %v1712, 0.5
        %v1850 = vmul.f32 %v1714, 0.5
        %v1851 = vmul.f32 %v1841, 0.5
        %v1852 = vmul.f32 %v1843, 0.5
        %v1853 = vmul.f32 %v1716, 0.5
        %v1854 = vmul.f32 %v1718, 0.5
        %v1855 = vmul.f32 %v1845, 0.5
        %v1856 = vmul.f32 %v1847, 0.5
        %v1857 = vmul.f32 %v1712, 0.70710677
        %v1858 = vmul.f32 %v1714, 0.70710677
        %v1859 = vmul.f32 %v1841, 0.70710677
        %v1860 = vmul.f32 %v1843, 0.70710677
        %v1861 = vmul.f32 %v1716, 0.70710677
        %v1862 = vmul.f32 %v1718, 0.70710677
        %v1863 = vmul.f32 %v1845, 0.70710677
        %v1864 = vmul.f32 %v1847, 0.70710677
        %v1865 = verf.f32.pop %v1857
        %v1866 = verf.f32.pop %v1858
        %v1867 = verf.f32.pop %v1859
        %v1868 = verf.f32.pop %v1860
        %v1869 = verf.f32.pop %v1861
        %v1870 = verf.f32.pop %v1862
        %v1871 = verf.f32.pop %v1863
        %v1872 = verf.f32.pop %v1864
        %v1873 = vadd.f32 %v1865, 1.0
        %v1874 = vadd.f32 %v1866, 1.0
        %v1875 = vadd.f32 %v1867, 1.0
        %v1876 = vadd.f32 %v1868, 1.0
        %v1877 = vadd.f32 %v1869, 1.0
        %v1878 = vadd.f32 %v1870, 1.0
        %v1879 = vadd.f32 %v1871, 1.0
        %v1880 = vadd.f32 %v1872, 1.0
        %v1881 = vmul.f32 %v1849, %v1873
        %v1882 = vmul.f32 %v1850, %v1874
        %v1883 = vmul.f32 %v1851, %v1875
        %v1884 = vmul.f32 %v1852, %v1876
        %v1885 = vmul.f32 %v1853, %v1877
        %v1886 = vmul.f32 %v1854, %v1878
        %v1887 = vmul.f32 %v1855, %v1879
        %v1888 = vmul.f32 %v1856, %v1880
        %v1889 = vld [vmem:[#allocation2] sm:$0xff]
        %v1890 = vld [vmem:[#allocation2 + $0x8] sm:$0xff]
        %v1891 = vld [vmem:[#allocation2 + $0x10] sm:$0xff]
        %v1892 = vld [vmem:[#allocation2 + $0x18] sm:$0xff]
        %v1893 = vld [vmem:[#allocation2 + $0x20] sm:$0xff]
        %v1894 = vld [vmem:[#allocation2 + $0x28] sm:$0xff]
        %v1895 = vld [vmem:[#allocation2 + $0x30] sm:$0xff]
        %v1896 = vld [vmem:[#allocation2 + $0x38] sm:$0xff]
        %v1897 = vld [vmem:[#allocation2 + $0x40] sm:$0xff]
        %v1898 = vld [vmem:[#allocation2 + $0x48] sm:$0xff]
        %v1899 = vld [vmem:[#allocation2 + $0x50] sm:$0xff]
        %v1900 = vld [vmem:[#allocation2 + $0x58] sm:$0xff]
        %v1901 = vpack.c.bf16 %v1885, %v1881
        %v1902 = vpack.c.bf16 %v1886, %v1882
        %v1903 = vpack.c.bf16 %v1887, %v1883
        %v1904 = vpack.c.bf16 %v1888, %v1884
        %v1905 = vld [vmem:[%s324] sm:$0xff]
        %v1906 = vld [vmem:[%s324 + $0x8] sm:$0xff]
        %v1907 = vld [vmem:[%s324 + $0x10] sm:$0xff]
        %v1908 = vld [vmem:[%s324 + $0x18] sm:$0xff]
        %v1909 = vld [vmem:[%s324 + $0x20] sm:$0xff]
        %v1910 = vld [vmem:[%s324 + $0x28] sm:$0xff]
        %v1911 = vld [vmem:[%s324 + $0x30] sm:$0xff]
        %v1912 = vld [vmem:[%s324 + $0x38] sm:$0xff]
        %v1913 = vld [vmem:[%s324 + $0x40] sm:$0xff]
        %v1914 = vld [vmem:[%s324 + $0x48] sm:$0xff]
        %v1915 = vld [vmem:[%s324 + $0x50] sm:$0xff]
        %v1916 = vld [vmem:[%s324 + $0x58] sm:$0xff]
        %v1917 = vld [vmem:[%s324 + $0x60] sm:$0xff]
        %v1918 = vld [vmem:[%s324 + $0x68] sm:$0xff]
        %v1919 = vld [vmem:[%s324 + $0x70] sm:$0xff]
        %v1920 = vld [vmem:[%s324 + $0x78] sm:$0xff]
        %v1921 = vld [vmem:[%s324 + $0x80] sm:$0xff]
        %v1922 = vld [vmem:[%s324 + $0x88] sm:$0xff]
        %v1923 = vld [vmem:[%s324 + $0x90] sm:$0xff]
        %v1924 = vld [vmem:[%s324 + $0x98] sm:$0xff]
        %v1925 = vld [vmem:[%s324 + $0xa0] sm:$0xff]
        %v1926 = vld [vmem:[%s324 + $0xa8] sm:$0xff]
        %v1927 = vld [vmem:[%s324 + $0xb0] sm:$0xff]
        %v1928 = vld [vmem:[%s324 + $0xb8] sm:$0xff]
        %v1929 = vld [vmem:[%s324 + $0xc0] sm:$0xff]
        %v1930 = vld [vmem:[%s324 + $0xc8] sm:$0xff]
        %v1931 = vld [vmem:[%s324 + $0xd0] sm:$0xff]
        %v1932 = vld [vmem:[%s324 + $0xd8] sm:$0xff]
        %v1933 = vld [vmem:[%s324 + $0xe0] sm:$0xff]
        %v1934 = vld [vmem:[%s324 + $0xe8] sm:$0xff]
        %v1935 = vld [vmem:[%s324 + $0xf0] sm:$0xff]
        %v1936 = vld [vmem:[%s324 + $0xf8] sm:$0xff]
        %v1937 = vld [vmem:[%s324 + $0x100] sm:$0xff]
        %v1938 = vld [vmem:[%s324 + $0x108] sm:$0xff]
        %v1939 = vld [vmem:[%s324 + $0x110] sm:$0xff]
        %v1940 = vld [vmem:[%s324 + $0x118] sm:$0xff]
        %v1941 = vld [vmem:[%s324 + $0x120] sm:$0xff]
        %v1942 = vld [vmem:[%s324 + $0x128] sm:$0xff]
        %v1943 = vld [vmem:[%s324 + $0x130] sm:$0xff]
        %v1944 = vld [vmem:[%s324 + $0x138] sm:$0xff]
        %v1945 = vld [vmem:[%s324 + $0x140] sm:$0xff]
        %v1946 = vld [vmem:[%s324 + $0x148] sm:$0xff]
        %v1947 = vld [vmem:[%s324 + $0x150] sm:$0xff]
        %v1948 = vld [vmem:[%s324 + $0x158] sm:$0xff]
        %v1949 = vld [vmem:[%s324 + $0x160] sm:$0xff]
        %v1950 = vld [vmem:[%s324 + $0x168] sm:$0xff]
        %v1951 = vld [vmem:[%s324 + $0x170] sm:$0xff]
        %v1952 = vld [vmem:[%s324 + $0x178] sm:$0xff]
        %v1953 = vld [vmem:[%s324 + $0x180] sm:$0xff]
        %v1954 = vld [vmem:[%s324 + $0x188] sm:$0xff]
        %v1955 = vld [vmem:[%s324 + $0x190] sm:$0xff]
        %v1956 = vld [vmem:[%s324 + $0x198] sm:$0xff]
        %v1957 = vld [vmem:[%s324 + $0x1a0] sm:$0xff]
        %v1958 = vld [vmem:[%s324 + $0x1a8] sm:$0xff]
        %v1959 = vld [vmem:[%s324 + $0x1b0] sm:$0xff]
        %v1960 = vld [vmem:[%s324 + $0x1b8] sm:$0xff]
        %v1961 = vld [vmem:[%s324 + $0x1c0] sm:$0xff]
        %v1962 = vld [vmem:[%s324 + $0x1c8] sm:$0xff]
        %v1963 = vld [vmem:[%s324 + $0x1d0] sm:$0xff]
        %v1964 = vld [vmem:[%s324 + $0x1d8] sm:$0xff]
        %v1965 = vld [vmem:[%s324 + $0x1e0] sm:$0xff]
        %v1966 = vld [vmem:[%s324 + $0x1e8] sm:$0xff]
        %v1967 = vld [vmem:[%s324 + $0x1f0] sm:$0xff]
        %v1968 = vld [vmem:[%s324 + $0x1f8] sm:$0xff]
        %v1969 = vld [vmem:[%s324 + $0x200] sm:$0xff]
        %v1970 = vld [vmem:[%s324 + $0x208] sm:$0xff]
        %v1971 = vld [vmem:[%s324 + $0x210] sm:$0xff]
        %v1972 = vld [vmem:[%s324 + $0x218] sm:$0xff]
        %v1973 = vld [vmem:[%s324 + $0x220] sm:$0xff]
        %v1974 = vld [vmem:[%s324 + $0x228] sm:$0xff]
        %v1975 = vld [vmem:[%s324 + $0x230] sm:$0xff]
        %v1976 = vld [vmem:[%s324 + $0x238] sm:$0xff]
        %v1977 = vld [vmem:[%s324 + $0x240] sm:$0xff]
        %v1978 = vld [vmem:[%s324 + $0x248] sm:$0xff]
        %v1979 = vld [vmem:[%s324 + $0x250] sm:$0xff]
        %v1980 = vld [vmem:[%s324 + $0x258] sm:$0xff]
        %v1981 = vld [vmem:[%s324 + $0x260] sm:$0xff]
        %v1982 = vld [vmem:[%s324 + $0x268] sm:$0xff]
        %v1983 = vld [vmem:[%s324 + $0x270] sm:$0xff]
        %v1984 = vld [vmem:[%s324 + $0x278] sm:$0xff]
        %v1985 = vld [vmem:[%s324 + $0x280] sm:$0xff]
        %v1986 = vld [vmem:[%s324 + $0x288] sm:$0xff]
        %v1987 = vld [vmem:[%s324 + $0x290] sm:$0xff]
        %v1988 = vld [vmem:[%s324 + $0x298] sm:$0xff]
        %v1989 = vld [vmem:[%s324 + $0x2a0] sm:$0xff]
        %v1990 = vld [vmem:[%s324 + $0x2a8] sm:$0xff]
        %v1991 = vld [vmem:[%s324 + $0x2b0] sm:$0xff]
        %v1992 = vld [vmem:[%s324 + $0x2b8] sm:$0xff]
        %v1993 = vld [vmem:[%s324 + $0x2c0] sm:$0xff]
        %v1994 = vld [vmem:[%s324 + $0x2c8] sm:$0xff]
        %v1995 = vld [vmem:[%s324 + $0x2d0] sm:$0xff]
        %v1996 = vld [vmem:[%s324 + $0x2d8] sm:$0xff]
        %v1997 = vld [vmem:[%s324 + $0x2e0] sm:$0xff]
        %v1998 = vld [vmem:[%s324 + $0x2e8] sm:$0xff]
        %v1999 = vld [vmem:[%s324 + $0x2f0] sm:$0xff]
        %v2000 = vld [vmem:[%s324 + $0x2f8] sm:$0xff]
        %v2001 = vld [vmem:[%s324 + $0x300] sm:$0xff]
        %v2002 = vld [vmem:[%s324 + $0x308] sm:$0xff]
        %v2003 = vld [vmem:[%s324 + $0x310] sm:$0xff]
        %v2004 = vld [vmem:[%s324 + $0x318] sm:$0xff]
        %v2005 = vld [vmem:[%s324 + $0x320] sm:$0xff]
        %v2006 = vld [vmem:[%s324 + $0x328] sm:$0xff]
        %v2007 = vld [vmem:[%s324 + $0x330] sm:$0xff]
        %v2008 = vld [vmem:[%s324 + $0x338] sm:$0xff]
        %v2009 = vld [vmem:[%s324 + $0x340] sm:$0xff]
        %v2010 = vld [vmem:[%s324 + $0x348] sm:$0xff]
        %v2011 = vld [vmem:[%s324 + $0x350] sm:$0xff]
        %v2012 = vld [vmem:[%s324 + $0x358] sm:$0xff]
        %v2013 = vld [vmem:[%s324 + $0x360] sm:$0xff]
        %v2014 = vld [vmem:[%s324 + $0x368] sm:$0xff]
        %v2015 = vld [vmem:[%s324 + $0x370] sm:$0xff]
        %v2016 = vld [vmem:[%s324 + $0x378] sm:$0xff]
        %v2017 = vld [vmem:[%s324 + $0x380] sm:$0xff]
        %v2018 = vld [vmem:[%s324 + $0x388] sm:$0xff]
        %v2019 = vld [vmem:[%s324 + $0x390] sm:$0xff]
        %v2020 = vld [vmem:[%s324 + $0x398] sm:$0xff]
        %v2021 = vld [vmem:[%s324 + $0x3a0] sm:$0xff]
        %v2022 = vld [vmem:[%s324 + $0x3a8] sm:$0xff]
        %v2023 = vld [vmem:[%s324 + $0x3b0] sm:$0xff]
        %v2024 = vld [vmem:[%s324 + $0x3b8] sm:$0xff]
        %v2025 = vld [vmem:[%s324 + $0x3c0] sm:$0xff]
        %v2026 = vld [vmem:[%s324 + $0x3c8] sm:$0xff]
        %v2027 = vld [vmem:[%s324 + $0x3d0] sm:$0xff]
        %v2028 = vld [vmem:[%s324 + $0x3d8] sm:$0xff]
        %v2029 = vld [vmem:[%s324 + $0x3e0] sm:$0xff]
        %v2030 = vld [vmem:[%s324 + $0x3e8] sm:$0xff]
        %v2031 = vld [vmem:[%s324 + $0x3f0] sm:$0xff]
        %v2032 = vld [vmem:[%s324 + $0x3f8] sm:$0xff]
        %v2033 = vld [vmem:[%s324 + $0x400] sm:$0xff]
        %v2034 = vld [vmem:[%s324 + $0x408] sm:$0xff]
        %v2035 = vld [vmem:[%s324 + $0x410] sm:$0xff]
        %v2036 = vld [vmem:[%s324 + $0x418] sm:$0xff]
        %v2037 = vld [vmem:[%s324 + $0x420] sm:$0xff]
        %v2038 = vld [vmem:[%s324 + $0x428] sm:$0xff]
        %v2039 = vld [vmem:[%s324 + $0x430] sm:$0xff]
        %v2040 = vld [vmem:[%s324 + $0x438] sm:$0xff]
        %v2041 = vld [vmem:[%s324 + $0x440] sm:$0xff]
        %v2042 = vld [vmem:[%s324 + $0x448] sm:$0xff]
        %v2043 = vld [vmem:[%s324 + $0x450] sm:$0xff]
        %v2044 = vld [vmem:[%s324 + $0x458] sm:$0xff]
        %v2045 = vld [vmem:[%s324 + $0x460] sm:$0xff]
        %v2046 = vld [vmem:[%s324 + $0x468] sm:$0xff]
        %v2047 = vld [vmem:[%s324 + $0x470] sm:$0xff]
        %v2048 = vld [vmem:[%s324 + $0x478] sm:$0xff]
        %v2049 = vld [vmem:[%s324 + $0x480] sm:$0xff]
        %v2050 = vld [vmem:[%s324 + $0x488] sm:$0xff]
        %v2051 = vld [vmem:[%s324 + $0x490] sm:$0xff]
        %v2052 = vld [vmem:[%s324 + $0x498] sm:$0xff]
        %v2053 = vld [vmem:[%s324 + $0x4a0] sm:$0xff]
        %v2054 = vld [vmem:[%s324 + $0x4a8] sm:$0xff]
        %v2055 = vld [vmem:[%s324 + $0x4b0] sm:$0xff]
        %v2056 = vld [vmem:[%s324 + $0x4b8] sm:$0xff]
        %v2057 = vld [vmem:[%s324 + $0x4c0] sm:$0xff]
        %v2058 = vld [vmem:[%s324 + $0x4c8] sm:$0xff]
        %v2059 = vld [vmem:[%s324 + $0x4d0] sm:$0xff]
        %v2060 = vld [vmem:[%s324 + $0x4d8] sm:$0xff]
        %v2061 = vld [vmem:[%s324 + $0x4e0] sm:$0xff]
        %v2062 = vld [vmem:[%s324 + $0x4e8] sm:$0xff]
        %v2063 = vld [vmem:[%s324 + $0x4f0] sm:$0xff]
        %v2064 = vld [vmem:[%s324 + $0x4f8] sm:$0xff]
        %v2065 = vld [vmem:[%s324 + $0x500] sm:$0xff]
        %v2066 = vld [vmem:[%s324 + $0x508] sm:$0xff]
        %v2067 = vld [vmem:[%s324 + $0x510] sm:$0xff]
        %v2068 = vld [vmem:[%s324 + $0x518] sm:$0xff]
        %v2069 = vld [vmem:[%s324 + $0x520] sm:$0xff]
        %v2070 = vld [vmem:[%s324 + $0x528] sm:$0xff]
        %v2071 = vld [vmem:[%s324 + $0x530] sm:$0xff]
        %v2072 = vld [vmem:[%s324 + $0x538] sm:$0xff]
        %v2073 = vld [vmem:[%s324 + $0x540] sm:$0xff]
        %v2074 = vld [vmem:[%s324 + $0x548] sm:$0xff]
        %v2075 = vld [vmem:[%s324 + $0x550] sm:$0xff]
        %v2076 = vld [vmem:[%s324 + $0x558] sm:$0xff]
        %v2077 = vld [vmem:[%s324 + $0x560] sm:$0xff]
        %v2078 = vld [vmem:[%s324 + $0x568] sm:$0xff]
        %v2079 = vld [vmem:[%s324 + $0x570] sm:$0xff]
        %v2080 = vld [vmem:[%s324 + $0x578] sm:$0xff]
        %v2081 = vld [vmem:[%s324 + $0x580] sm:$0xff]
        %v2082 = vld [vmem:[%s324 + $0x588] sm:$0xff]
        %v2083 = vld [vmem:[%s324 + $0x590] sm:$0xff]
        %v2084 = vld [vmem:[%s324 + $0x598] sm:$0xff]
        %v2085 = vld [vmem:[%s324 + $0x5a0] sm:$0xff]
        %v2086 = vld [vmem:[%s324 + $0x5a8] sm:$0xff]
        %v2087 = vld [vmem:[%s324 + $0x5b0] sm:$0xff]
        %v2088 = vld [vmem:[%s324 + $0x5b8] sm:$0xff]
        %v2089 = vld [vmem:[%s324 + $0x5c0] sm:$0xff]
        %v2090 = vld [vmem:[%s324 + $0x5c8] sm:$0xff]
        %v2091 = vld [vmem:[%s324 + $0x5d0] sm:$0xff]
        %v2092 = vld [vmem:[%s324 + $0x5d8] sm:$0xff]
        %v2093 = vld [vmem:[%s324 + $0x5e0] sm:$0xff]
        %v2094 = vld [vmem:[%s324 + $0x5e8] sm:$0xff]
        %v2095 = vld [vmem:[%s324 + $0x5f0] sm:$0xff]
        %v2096 = vld [vmem:[%s324 + $0x5f8] sm:$0xff]
        %v2289 = vunpack.c.l.b16 %v1905
        %v2290 = vunpack.c.h.b16 %v1905
        %v2291 = vunpack.c.l.b16 %v1906
        %v2292 = vunpack.c.h.b16 %v1906
        %v2293 = vunpack.c.l.b16 %v1907
        %v2294 = vunpack.c.h.b16 %v1907
        %v2295 = vunpack.c.l.b16 %v1908
        %v2296 = vunpack.c.h.b16 %v1908
        %v2297 = vunpack.c.l.b16 %v1909
        %v2298 = vunpack.c.h.b16 %v1909
        %v2299 = vunpack.c.l.b16 %v1910
        %v2300 = vunpack.c.h.b16 %v1910
        %v2301 = vunpack.c.l.b16 %v1911
        %v2302 = vunpack.c.h.b16 %v1911
        %v2303 = vunpack.c.l.b16 %v1912
        %v2304 = vunpack.c.h.b16 %v1912
        %v2305 = vunpack.c.l.b16 %v1913
        %v2306 = vunpack.c.h.b16 %v1913
        %v2307 = vunpack.c.l.b16 %v1914
        %v2308 = vunpack.c.h.b16 %v1914
        %v2309 = vunpack.c.l.b16 %v1915
        %v2310 = vunpack.c.h.b16 %v1915
        %v2311 = vunpack.c.l.b16 %v1916
        %v2312 = vunpack.c.h.b16 %v1916
        %v2313 = vunpack.c.l.b16 %v1917
        %v2314 = vunpack.c.h.b16 %v1917
        %v2315 = vunpack.c.l.b16 %v1918
        %v2316 = vunpack.c.h.b16 %v1918
        %v2317 = vunpack.c.l.b16 %v1919
        %v2318 = vunpack.c.h.b16 %v1919
        %v2319 = vunpack.c.l.b16 %v1920
        %v2320 = vunpack.c.h.b16 %v1920
        %v2321 = vunpack.c.l.b16 %v1921
        %v2322 = vunpack.c.h.b16 %v1921
        %v2323 = vunpack.c.l.b16 %v1922
        %v2324 = vunpack.c.h.b16 %v1922
        %v2325 = vunpack.c.l.b16 %v1923
        %v2326 = vunpack.c.h.b16 %v1923
        %v2327 = vunpack.c.l.b16 %v1924
        %v2328 = vunpack.c.h.b16 %v1924
        %v2329 = vunpack.c.l.b16 %v1925
        %v2330 = vunpack.c.h.b16 %v1925
        %v2331 = vunpack.c.l.b16 %v1926
        %v2332 = vunpack.c.h.b16 %v1926
        %v2333 = vunpack.c.l.b16 %v1927
        %v2334 = vunpack.c.h.b16 %v1927
        %v2335 = vunpack.c.l.b16 %v1928
        %v2336 = vunpack.c.h.b16 %v1928
        %v2337 = vunpack.c.l.b16 %v1929
        %v2338 = vunpack.c.h.b16 %v1929
        %v2339 = vunpack.c.l.b16 %v1930
        %v2340 = vunpack.c.h.b16 %v1930
        %v2341 = vunpack.c.l.b16 %v1931
        %v2342 = vunpack.c.h.b16 %v1931
        %v2343 = vunpack.c.l.b16 %v1932
        %v2344 = vunpack.c.h.b16 %v1932
        %v2345 = vunpack.c.l.b16 %v1933
        %v2346 = vunpack.c.h.b16 %v1933
        %v2347 = vunpack.c.l.b16 %v1934
        %v2348 = vunpack.c.h.b16 %v1934
        %v2349 = vunpack.c.l.b16 %v1935
        %v2350 = vunpack.c.h.b16 %v1935
        %v2351 = vunpack.c.l.b16 %v1936
        %v2352 = vunpack.c.h.b16 %v1936
        %v2353 = vunpack.c.l.b16 %v1937
        %v2354 = vunpack.c.h.b16 %v1937
        %v2355 = vunpack.c.l.b16 %v1938
        %v2356 = vunpack.c.h.b16 %v1938
        %v2357 = vunpack.c.l.b16 %v1939
        %v2358 = vunpack.c.h.b16 %v1939
        %v2359 = vunpack.c.l.b16 %v1940
        %v2360 = vunpack.c.h.b16 %v1940
        %v2361 = vunpack.c.l.b16 %v1941
        %v2362 = vunpack.c.h.b16 %v1941
        %v2363 = vunpack.c.l.b16 %v1942
        %v2364 = vunpack.c.h.b16 %v1942
        %v2365 = vunpack.c.l.b16 %v1943
        %v2366 = vunpack.c.h.b16 %v1943
        %v2367 = vunpack.c.l.b16 %v1944
        %v2368 = vunpack.c.h.b16 %v1944
        %v2369 = vunpack.c.l.b16 %v1945
        %v2370 = vunpack.c.h.b16 %v1945
        %v2371 = vunpack.c.l.b16 %v1946
        %v2372 = vunpack.c.h.b16 %v1946
        %v2373 = vunpack.c.l.b16 %v1947
        %v2374 = vunpack.c.h.b16 %v1947
        %v2375 = vunpack.c.l.b16 %v1948
        %v2376 = vunpack.c.h.b16 %v1948
        %v2377 = vunpack.c.l.b16 %v1949
        %v2378 = vunpack.c.h.b16 %v1949
        %v2379 = vunpack.c.l.b16 %v1950
        %v2380 = vunpack.c.h.b16 %v1950
        %v2381 = vunpack.c.l.b16 %v1951
        %v2382 = vunpack.c.h.b16 %v1951
        %v2383 = vunpack.c.l.b16 %v1952
        %v2384 = vunpack.c.h.b16 %v1952
        %v2385 = vunpack.c.l.b16 %v1953
        %v2386 = vunpack.c.h.b16 %v1953
        %v2387 = vunpack.c.l.b16 %v1954
        %v2388 = vunpack.c.h.b16 %v1954
        %v2389 = vunpack.c.l.b16 %v1955
        %v2390 = vunpack.c.h.b16 %v1955
        %v2391 = vunpack.c.l.b16 %v1956
        %v2392 = vunpack.c.h.b16 %v1956
        %v2393 = vunpack.c.l.b16 %v1957
        %v2394 = vunpack.c.h.b16 %v1957
        %v2395 = vunpack.c.l.b16 %v1958
        %v2396 = vunpack.c.h.b16 %v1958
        %v2397 = vunpack.c.l.b16 %v1959
        %v2398 = vunpack.c.h.b16 %v1959
        %v2399 = vunpack.c.l.b16 %v1960
        %v2400 = vunpack.c.h.b16 %v1960
        %v2401 = vunpack.c.l.b16 %v1961
        %v2402 = vunpack.c.h.b16 %v1961
        %v2403 = vunpack.c.l.b16 %v1962
        %v2404 = vunpack.c.h.b16 %v1962
        %v2405 = vunpack.c.l.b16 %v1963
        %v2406 = vunpack.c.h.b16 %v1963
        %v2407 = vunpack.c.l.b16 %v1964
        %v2408 = vunpack.c.h.b16 %v1964
        %v2409 = vunpack.c.l.b16 %v1965
        %v2410 = vunpack.c.h.b16 %v1965
        %v2411 = vunpack.c.l.b16 %v1966
        %v2412 = vunpack.c.h.b16 %v1966
        %v2413 = vunpack.c.l.b16 %v1967
        %v2414 = vunpack.c.h.b16 %v1967
        %v2415 = vunpack.c.l.b16 %v1968
        %v2416 = vunpack.c.h.b16 %v1968
        %v2417 = vunpack.c.l.b16 %v1969
        %v2418 = vunpack.c.h.b16 %v1969
        %v2419 = vunpack.c.l.b16 %v1970
        %v2420 = vunpack.c.h.b16 %v1970
        %v2421 = vunpack.c.l.b16 %v1971
        %v2422 = vunpack.c.h.b16 %v1971
        %v2423 = vunpack.c.l.b16 %v1972
        %v2424 = vunpack.c.h.b16 %v1972
        %v2425 = vunpack.c.l.b16 %v1973
        %v2426 = vunpack.c.h.b16 %v1973
        %v2427 = vunpack.c.l.b16 %v1974
        %v2428 = vunpack.c.h.b16 %v1974
        %v2429 = vunpack.c.l.b16 %v1975
        %v2430 = vunpack.c.h.b16 %v1975
        %v2431 = vunpack.c.l.b16 %v1976
        %v2432 = vunpack.c.h.b16 %v1976
        %v2433 = vunpack.c.l.b16 %v1977
        %v2434 = vunpack.c.h.b16 %v1977
        %v2435 = vunpack.c.l.b16 %v1978
        %v2436 = vunpack.c.h.b16 %v1978
        %v2437 = vunpack.c.l.b16 %v1979
        %v2438 = vunpack.c.h.b16 %v1979
        %v2439 = vunpack.c.l.b16 %v1980
        %v2440 = vunpack.c.h.b16 %v1980
        %v2441 = vunpack.c.l.b16 %v1981
        %v2442 = vunpack.c.h.b16 %v1981
        %v2443 = vunpack.c.l.b16 %v1982
        %v2444 = vunpack.c.h.b16 %v1982
        %v2445 = vunpack.c.l.b16 %v1983
        %v2446 = vunpack.c.h.b16 %v1983
        %v2447 = vunpack.c.l.b16 %v1984
        %v2448 = vunpack.c.h.b16 %v1984
        %v2449 = vunpack.c.l.b16 %v1985
        %v2450 = vunpack.c.h.b16 %v1985
        %v2451 = vunpack.c.l.b16 %v1986
        %v2452 = vunpack.c.h.b16 %v1986
        %v2453 = vunpack.c.l.b16 %v1987
        %v2454 = vunpack.c.h.b16 %v1987
        %v2455 = vunpack.c.l.b16 %v1988
        %v2456 = vunpack.c.h.b16 %v1988
        %v2457 = vunpack.c.l.b16 %v1989
        %v2458 = vunpack.c.h.b16 %v1989
        %v2459 = vunpack.c.l.b16 %v1990
        %v2460 = vunpack.c.h.b16 %v1990
        %v2461 = vunpack.c.l.b16 %v1991
        %v2462 = vunpack.c.h.b16 %v1991
        %v2463 = vunpack.c.l.b16 %v1992
        %v2464 = vunpack.c.h.b16 %v1992
        %v2465 = vunpack.c.l.b16 %v1993
        %v2466 = vunpack.c.h.b16 %v1993
        %v2467 = vunpack.c.l.b16 %v1994
        %v2468 = vunpack.c.h.b16 %v1994
        %v2469 = vunpack.c.l.b16 %v1995
        %v2470 = vunpack.c.h.b16 %v1995
        %v2471 = vunpack.c.l.b16 %v1996
        %v2472 = vunpack.c.h.b16 %v1996
        %v2473 = vunpack.c.l.b16 %v1997
        %v2474 = vunpack.c.h.b16 %v1997
        %v2475 = vunpack.c.l.b16 %v1998
        %v2476 = vunpack.c.h.b16 %v1998
        %v2477 = vunpack.c.l.b16 %v1999
        %v2478 = vunpack.c.h.b16 %v1999
        %v2479 = vunpack.c.l.b16 %v2000
        %v2480 = vunpack.c.h.b16 %v2000
        %v2481 = vunpack.c.l.b16 %v2001
        %v2482 = vunpack.c.h.b16 %v2001
        %v2483 = vunpack.c.l.b16 %v2002
        %v2484 = vunpack.c.h.b16 %v2002
        %v2485 = vunpack.c.l.b16 %v2003
        %v2486 = vunpack.c.h.b16 %v2003
        %v2487 = vunpack.c.l.b16 %v2004
        %v2488 = vunpack.c.h.b16 %v2004
        %v2489 = vunpack.c.l.b16 %v2005
        %v2490 = vunpack.c.h.b16 %v2005
        %v2491 = vunpack.c.l.b16 %v2006
        %v2492 = vunpack.c.h.b16 %v2006
        %v2493 = vunpack.c.l.b16 %v2007
        %v2494 = vunpack.c.h.b16 %v2007
        %v2495 = vunpack.c.l.b16 %v2008
        %v2496 = vunpack.c.h.b16 %v2008
        %v2497 = vunpack.c.l.b16 %v2009
        %v2498 = vunpack.c.h.b16 %v2009
        %v2499 = vunpack.c.l.b16 %v2010
        %v2500 = vunpack.c.h.b16 %v2010
        %v2501 = vunpack.c.l.b16 %v2011
        %v2502 = vunpack.c.h.b16 %v2011
        %v2503 = vunpack.c.l.b16 %v2012
        %v2504 = vunpack.c.h.b16 %v2012
        %v2505 = vunpack.c.l.b16 %v2013
        %v2506 = vunpack.c.h.b16 %v2013
        %v2507 = vunpack.c.l.b16 %v2014
        %v2508 = vunpack.c.h.b16 %v2014
        %v2509 = vunpack.c.l.b16 %v2015
        %v2510 = vunpack.c.h.b16 %v2015
        %v2511 = vunpack.c.l.b16 %v2016
        %v2512 = vunpack.c.h.b16 %v2016
        %v2513 = vunpack.c.l.b16 %v2017
        %v2514 = vunpack.c.h.b16 %v2017
        %v2515 = vunpack.c.l.b16 %v2018
        %v2516 = vunpack.c.h.b16 %v2018
        %v2517 = vunpack.c.l.b16 %v2019
        %v2518 = vunpack.c.h.b16 %v2019
        %v2519 = vunpack.c.l.b16 %v2020
        %v2520 = vunpack.c.h.b16 %v2020
        %v2521 = vunpack.c.l.b16 %v2021
        %v2522 = vunpack.c.h.b16 %v2021
        %v2523 = vunpack.c.l.b16 %v2022
        %v2524 = vunpack.c.h.b16 %v2022
        %v2525 = vunpack.c.l.b16 %v2023
        %v2526 = vunpack.c.h.b16 %v2023
        %v2527 = vunpack.c.l.b16 %v2024
        %v2528 = vunpack.c.h.b16 %v2024
        %v2529 = vunpack.c.l.b16 %v2025
        %v2530 = vunpack.c.h.b16 %v2025
        %v2531 = vunpack.c.l.b16 %v2026
        %v2532 = vunpack.c.h.b16 %v2026
        %v2533 = vunpack.c.l.b16 %v2027
        %v2534 = vunpack.c.h.b16 %v2027
        %v2535 = vunpack.c.l.b16 %v2028
        %v2536 = vunpack.c.h.b16 %v2028
        %v2537 = vunpack.c.l.b16 %v2029
        %v2538 = vunpack.c.h.b16 %v2029
        %v2539 = vunpack.c.l.b16 %v2030
        %v2540 = vunpack.c.h.b16 %v2030
        %v2541 = vunpack.c.l.b16 %v2031
        %v2542 = vunpack.c.h.b16 %v2031
        %v2543 = vunpack.c.l.b16 %v2032
        %v2544 = vunpack.c.h.b16 %v2032
        %v2545 = vunpack.c.l.b16 %v2033
        %v2546 = vunpack.c.h.b16 %v2033
        %v2547 = vunpack.c.l.b16 %v2034
        %v2548 = vunpack.c.h.b16 %v2034
        %v2549 = vunpack.c.l.b16 %v2035
        %v2550 = vunpack.c.h.b16 %v2035
        %v2551 = vunpack.c.l.b16 %v2036
        %v2552 = vunpack.c.h.b16 %v2036
        %v2553 = vunpack.c.l.b16 %v2037
        %v2554 = vunpack.c.h.b16 %v2037
        %v2555 = vunpack.c.l.b16 %v2038
        %v2556 = vunpack.c.h.b16 %v2038
        %v2557 = vunpack.c.l.b16 %v2039
        %v2558 = vunpack.c.h.b16 %v2039
        %v2559 = vunpack.c.l.b16 %v2040
        %v2560 = vunpack.c.h.b16 %v2040
        %v2561 = vunpack.c.l.b16 %v2041
        %v2562 = vunpack.c.h.b16 %v2041
        %v2563 = vunpack.c.l.b16 %v2042
        %v2564 = vunpack.c.h.b16 %v2042
        %v2565 = vunpack.c.l.b16 %v2043
        %v2566 = vunpack.c.h.b16 %v2043
        %v2567 = vunpack.c.l.b16 %v2044
        %v2568 = vunpack.c.h.b16 %v2044
        %v2569 = vunpack.c.l.b16 %v2045
        %v2570 = vunpack.c.h.b16 %v2045
        %v2571 = vunpack.c.l.b16 %v2046
        %v2572 = vunpack.c.h.b16 %v2046
        %v2573 = vunpack.c.l.b16 %v2047
        %v2574 = vunpack.c.h.b16 %v2047
        %v2575 = vunpack.c.l.b16 %v2048
        %v2576 = vunpack.c.h.b16 %v2048
        %v2577 = vunpack.c.l.b16 %v2049
        %v2578 = vunpack.c.h.b16 %v2049
        %v2579 = vunpack.c.l.b16 %v2050
        %v2580 = vunpack.c.h.b16 %v2050
        %v2581 = vunpack.c.l.b16 %v2051
        %v2582 = vunpack.c.h.b16 %v2051
        %v2583 = vunpack.c.l.b16 %v2052
        %v2584 = vunpack.c.h.b16 %v2052
        %v2585 = vunpack.c.l.b16 %v2053
        %v2586 = vunpack.c.h.b16 %v2053
        %v2587 = vunpack.c.l.b16 %v2054
        %v2588 = vunpack.c.h.b16 %v2054
        %v2589 = vunpack.c.l.b16 %v2055
        %v2590 = vunpack.c.h.b16 %v2055
        %v2591 = vunpack.c.l.b16 %v2056
        %v2592 = vunpack.c.h.b16 %v2056
        %v2593 = vunpack.c.l.b16 %v2057
        %v2594 = vunpack.c.h.b16 %v2057
        %v2595 = vunpack.c.l.b16 %v2058
        %v2596 = vunpack.c.h.b16 %v2058
        %v2597 = vunpack.c.l.b16 %v2059
        %v2598 = vunpack.c.h.b16 %v2059
        %v2599 = vunpack.c.l.b16 %v2060
        %v2600 = vunpack.c.h.b16 %v2060
        %v2601 = vunpack.c.l.b16 %v2061
        %v2602 = vunpack.c.h.b16 %v2061
        %v2603 = vunpack.c.l.b16 %v2062
        %v2604 = vunpack.c.h.b16 %v2062
        %v2605 = vunpack.c.l.b16 %v2063
        %v2606 = vunpack.c.h.b16 %v2063
        %v2607 = vunpack.c.l.b16 %v2064
        %v2608 = vunpack.c.h.b16 %v2064
        %v2609 = vunpack.c.l.b16 %v2065
        %v2610 = vunpack.c.h.b16 %v2065
        %v2611 = vunpack.c.l.b16 %v2066
        %v2612 = vunpack.c.h.b16 %v2066
        %v2613 = vunpack.c.l.b16 %v2067
        %v2614 = vunpack.c.h.b16 %v2067
        %v2615 = vunpack.c.l.b16 %v2068
        %v2616 = vunpack.c.h.b16 %v2068
        %v2617 = vunpack.c.l.b16 %v2069
        %v2618 = vunpack.c.h.b16 %v2069
        %v2619 = vunpack.c.l.b16 %v2070
        %v2620 = vunpack.c.h.b16 %v2070
        %v2621 = vunpack.c.l.b16 %v2071
        %v2622 = vunpack.c.h.b16 %v2071
        %v2623 = vunpack.c.l.b16 %v2072
        %v2624 = vunpack.c.h.b16 %v2072
        %v2625 = vunpack.c.l.b16 %v2073
        %v2626 = vunpack.c.h.b16 %v2073
        %v2627 = vunpack.c.l.b16 %v2074
        %v2628 = vunpack.c.h.b16 %v2074
        %v2629 = vunpack.c.l.b16 %v2075
        %v2630 = vunpack.c.h.b16 %v2075
        %v2631 = vunpack.c.l.b16 %v2076
        %v2632 = vunpack.c.h.b16 %v2076
        %v2633 = vunpack.c.l.b16 %v2077
        %v2634 = vunpack.c.h.b16 %v2077
        %v2635 = vunpack.c.l.b16 %v2078
        %v2636 = vunpack.c.h.b16 %v2078
        %v2637 = vunpack.c.l.b16 %v2079
        %v2638 = vunpack.c.h.b16 %v2079
        %v2639 = vunpack.c.l.b16 %v2080
        %v2640 = vunpack.c.h.b16 %v2080
        %v2641 = vunpack.c.l.b16 %v2081
        %v2642 = vunpack.c.h.b16 %v2081
        %v2643 = vunpack.c.l.b16 %v2082
        %v2644 = vunpack.c.h.b16 %v2082
        %v2645 = vunpack.c.l.b16 %v2083
        %v2646 = vunpack.c.h.b16 %v2083
        %v2647 = vunpack.c.l.b16 %v2084
        %v2648 = vunpack.c.h.b16 %v2084
        %v2649 = vunpack.c.l.b16 %v2085
        %v2650 = vunpack.c.h.b16 %v2085
        %v2651 = vunpack.c.l.b16 %v2086
        %v2652 = vunpack.c.h.b16 %v2086
        %v2653 = vunpack.c.l.b16 %v2087
        %v2654 = vunpack.c.h.b16 %v2087
        %v2655 = vunpack.c.l.b16 %v2088
        %v2656 = vunpack.c.h.b16 %v2088
        %v2657 = vunpack.c.l.b16 %v2089
        %v2658 = vunpack.c.h.b16 %v2089
        %v2659 = vunpack.c.l.b16 %v2090
        %v2660 = vunpack.c.h.b16 %v2090
        %v2661 = vunpack.c.l.b16 %v2091
        %v2662 = vunpack.c.h.b16 %v2091
        %v2663 = vunpack.c.l.b16 %v2092
        %v2664 = vunpack.c.h.b16 %v2092
        %v2665 = vunpack.c.l.b16 %v2093
        %v2666 = vunpack.c.h.b16 %v2093
        %v2667 = vunpack.c.l.b16 %v2094
        %v2668 = vunpack.c.h.b16 %v2094
        %v2669 = vunpack.c.l.b16 %v2095
        %v2670 = vunpack.c.h.b16 %v2095
        %v2671 = vunpack.c.l.b16 %v2096
        %v2672 = vunpack.c.h.b16 %v2096
        %v2673 = vpack.c.b16 %v2295, %v2289
        %v2674 = vpack.c.b16 %v2296, %v2290
        %v2675 = vpack.c.b16 %v2297, %v2291
        %v2676 = vpack.c.b16 %v2298, %v2292
        %v2677 = vpack.c.b16 %v2299, %v2293
        %v2678 = vpack.c.b16 %v2300, %v2294
        %v2679 = vpack.c.b16 %v2307, %v2301
        %v2680 = vpack.c.b16 %v2308, %v2302
        %v2681 = vpack.c.b16 %v2309, %v2303
        %v2682 = vpack.c.b16 %v2310, %v2304
        %v2683 = vpack.c.b16 %v2311, %v2305
        %v2684 = vpack.c.b16 %v2312, %v2306
        %v2685 = vpack.c.b16 %v2319, %v2313
        %v2686 = vpack.c.b16 %v2320, %v2314
        %v2687 = vpack.c.b16 %v2321, %v2315
        %v2688 = vpack.c.b16 %v2322, %v2316
        %v2689 = vpack.c.b16 %v2323, %v2317
        %v2690 = vpack.c.b16 %v2324, %v2318
        %v2691 = vpack.c.b16 %v2331, %v2325
        %v2692 = vpack.c.b16 %v2332, %v2326
        %v2693 = vpack.c.b16 %v2333, %v2327
        %v2694 = vpack.c.b16 %v2334, %v2328
        %v2695 = vpack.c.b16 %v2335, %v2329
        %v2696 = vpack.c.b16 %v2336, %v2330
        %v2697 = vpack.c.b16 %v2343, %v2337
        %v2698 = vpack.c.b16 %v2344, %v2338
        %v2699 = vpack.c.b16 %v2345, %v2339
        %v2700 = vpack.c.b16 %v2346, %v2340
        %v2701 = vpack.c.b16 %v2347, %v2341
        %v2702 = vpack.c.b16 %v2348, %v2342
        %v2703 = vpack.c.b16 %v2355, %v2349
        %v2704 = vpack.c.b16 %v2356, %v2350
        %v2705 = vpack.c.b16 %v2357, %v2351
        %v2706 = vpack.c.b16 %v2358, %v2352
        %v2707 = vpack.c.b16 %v2359, %v2353
        %v2708 = vpack.c.b16 %v2360, %v2354
        %v2709 = vpack.c.b16 %v2367, %v2361
        %v2710 = vpack.c.b16 %v2368, %v2362
        %v2711 = vpack.c.b16 %v2369, %v2363
        %v2712 = vpack.c.b16 %v2370, %v2364
        %v2713 = vpack.c.b16 %v2371, %v2365
        %v2714 = vpack.c.b16 %v2372, %v2366
        %v2715 = vpack.c.b16 %v2379, %v2373
        %v2716 = vpack.c.b16 %v2380, %v2374
        %v2717 = vpack.c.b16 %v2381, %v2375
        %v2718 = vpack.c.b16 %v2382, %v2376
        %v2719 = vpack.c.b16 %v2383, %v2377
        %v2720 = vpack.c.b16 %v2384, %v2378
        %v2721 = vpack.c.b16 %v2391, %v2385
        %v2722 = vpack.c.b16 %v2392, %v2386
        %v2723 = vpack.c.b16 %v2393, %v2387
        %v2724 = vpack.c.b16 %v2394, %v2388
        %v2725 = vpack.c.b16 %v2395, %v2389
        %v2726 = vpack.c.b16 %v2396, %v2390
        %v2727 = vpack.c.b16 %v2403, %v2397
        %v2728 = vpack.c.b16 %v2404, %v2398
        %v2729 = vpack.c.b16 %v2405, %v2399
        %v2730 = vpack.c.b16 %v2406, %v2400
        %v2731 = vpack.c.b16 %v2407, %v2401
        %v2732 = vpack.c.b16 %v2408, %v2402
        %v2733 = vpack.c.b16 %v2415, %v2409
        %v2734 = vpack.c.b16 %v2416, %v2410
        %v2735 = vpack.c.b16 %v2417, %v2411
        %v2736 = vpack.c.b16 %v2418, %v2412
        %v2737 = vpack.c.b16 %v2419, %v2413
        %v2738 = vpack.c.b16 %v2420, %v2414
        %v2739 = vpack.c.b16 %v2427, %v2421
        %v2740 = vpack.c.b16 %v2428, %v2422
        %v2741 = vpack.c.b16 %v2429, %v2423
        %v2742 = vpack.c.b16 %v2430, %v2424
        %v2743 = vpack.c.b16 %v2431, %v2425
        %v2744 = vpack.c.b16 %v2432, %v2426
        %v2745 = vpack.c.b16 %v2439, %v2433
        %v2746 = vpack.c.b16 %v2440, %v2434
        %v2747 = vpack.c.b16 %v2441, %v2435
        %v2748 = vpack.c.b16 %v2442, %v2436
        %v2749 = vpack.c.b16 %v2443, %v2437
        %v2750 = vpack.c.b16 %v2444, %v2438
        %v2751 = vpack.c.b16 %v2451, %v2445
        %v2752 = vpack.c.b16 %v2452, %v2446
        %v2753 = vpack.c.b16 %v2453, %v2447
        %v2754 = vpack.c.b16 %v2454, %v2448
        %v2755 = vpack.c.b16 %v2455, %v2449
        %v2756 = vpack.c.b16 %v2456, %v2450
        %v2757 = vpack.c.b16 %v2463, %v2457
        %v2758 = vpack.c.b16 %v2464, %v2458
        %v2759 = vpack.c.b16 %v2465, %v2459
        %v2760 = vpack.c.b16 %v2466, %v2460
        %v2761 = vpack.c.b16 %v2467, %v2461
        %v2762 = vpack.c.b16 %v2468, %v2462
        %v2763 = vpack.c.b16 %v2475, %v2469
        %v2764 = vpack.c.b16 %v2476, %v2470
        %v2765 = vpack.c.b16 %v2477, %v2471
        %v2766 = vpack.c.b16 %v2478, %v2472
        %v2767 = vpack.c.b16 %v2479, %v2473
        %v2768 = vpack.c.b16 %v2480, %v2474
        %v2769 = vpack.c.b16 %v2487, %v2481
        %v2770 = vpack.c.b16 %v2488, %v2482
        %v2771 = vpack.c.b16 %v2489, %v2483
        %v2772 = vpack.c.b16 %v2490, %v2484
        %v2773 = vpack.c.b16 %v2491, %v2485
        %v2774 = vpack.c.b16 %v2492, %v2486
        %v2775 = vpack.c.b16 %v2499, %v2493
        %v2776 = vpack.c.b16 %v2500, %v2494
        %v2777 = vpack.c.b16 %v2501, %v2495
        %v2778 = vpack.c.b16 %v2502, %v2496
        %v2779 = vpack.c.b16 %v2503, %v2497
        %v2780 = vpack.c.b16 %v2504, %v2498
        %v2781 = vpack.c.b16 %v2511, %v2505
        %v2782 = vpack.c.b16 %v2512, %v2506
        %v2783 = vpack.c.b16 %v2513, %v2507
        %v2784 = vpack.c.b16 %v2514, %v2508
        %v2785 = vpack.c.b16 %v2515, %v2509
        %v2786 = vpack.c.b16 %v2516, %v2510
        %v2787 = vpack.c.b16 %v2523, %v2517
        %v2788 = vpack.c.b16 %v2524, %v2518
        %v2789 = vpack.c.b16 %v2525, %v2519
        %v2790 = vpack.c.b16 %v2526, %v2520
        %v2791 = vpack.c.b16 %v2527, %v2521
        %v2792 = vpack.c.b16 %v2528, %v2522
        %v2793 = vpack.c.b16 %v2535, %v2529
        %v2794 = vpack.c.b16 %v2536, %v2530
        %v2795 = vpack.c.b16 %v2537, %v2531
        %v2796 = vpack.c.b16 %v2538, %v2532
        %v2797 = vpack.c.b16 %v2539, %v2533
        %v2798 = vpack.c.b16 %v2540, %v2534
        %v2799 = vpack.c.b16 %v2547, %v2541
        %v2800 = vpack.c.b16 %v2548, %v2542
        %v2801 = vpack.c.b16 %v2549, %v2543
        %v2802 = vpack.c.b16 %v2550, %v2544
        %v2803 = vpack.c.b16 %v2551, %v2545
        %v2804 = vpack.c.b16 %v2552, %v2546
        %v2805 = vpack.c.b16 %v2559, %v2553
        %v2806 = vpack.c.b16 %v2560, %v2554
        %v2807 = vpack.c.b16 %v2561, %v2555
        %v2808 = vpack.c.b16 %v2562, %v2556
        %v2809 = vpack.c.b16 %v2563, %v2557
        %v2810 = vpack.c.b16 %v2564, %v2558
        %v2811 = vpack.c.b16 %v2571, %v2565
        %v2812 = vpack.c.b16 %v2572, %v2566
        %v2813 = vpack.c.b16 %v2573, %v2567
        %v2814 = vpack.c.b16 %v2574, %v2568
        %v2815 = vpack.c.b16 %v2575, %v2569
        %v2816 = vpack.c.b16 %v2576, %v2570
        %v2817 = vpack.c.b16 %v2583, %v2577
        %v2818 = vpack.c.b16 %v2584, %v2578
        %v2819 = vpack.c.b16 %v2585, %v2579
        %v2820 = vpack.c.b16 %v2586, %v2580
        %v2821 = vpack.c.b16 %v2587, %v2581
        %v2822 = vpack.c.b16 %v2588, %v2582
        %v2823 = vpack.c.b16 %v2595, %v2589
        %v2824 = vpack.c.b16 %v2596, %v2590
        %v2825 = vpack.c.b16 %v2597, %v2591
        %v2826 = vpack.c.b16 %v2598, %v2592
        %v2827 = vpack.c.b16 %v2599, %v2593
        %v2828 = vpack.c.b16 %v2600, %v2594
        %v2829 = vpack.c.b16 %v2607, %v2601
        %v2830 = vpack.c.b16 %v2608, %v2602
        %v2831 = vpack.c.b16 %v2609, %v2603
        %v2832 = vpack.c.b16 %v2610, %v2604
        %v2833 = vpack.c.b16 %v2611, %v2605
        %v2834 = vpack.c.b16 %v2612, %v2606
        %v2835 = vpack.c.b16 %v2619, %v2613
        %v2836 = vpack.c.b16 %v2620, %v2614
        %v2837 = vpack.c.b16 %v2621, %v2615
        %v2838 = vpack.c.b16 %v2622, %v2616
        %v2839 = vpack.c.b16 %v2623, %v2617
        %v2840 = vpack.c.b16 %v2624, %v2618
        %v2841 = vpack.c.b16 %v2631, %v2625
        %v2842 = vpack.c.b16 %v2632, %v2626
        %v2843 = vpack.c.b16 %v2633, %v2627
        %v2844 = vpack.c.b16 %v2634, %v2628
        %v2845 = vpack.c.b16 %v2635, %v2629
        %v2846 = vpack.c.b16 %v2636, %v2630
        %v2847 = vpack.c.b16 %v2643, %v2637
        %v2848 = vpack.c.b16 %v2644, %v2638
        %v2849 = vpack.c.b16 %v2645, %v2639
        %v2850 = vpack.c.b16 %v2646, %v2640
        %v2851 = vpack.c.b16 %v2647, %v2641
        %v2852 = vpack.c.b16 %v2648, %v2642
        %v2853 = vpack.c.b16 %v2655, %v2649
        %v2854 = vpack.c.b16 %v2656, %v2650
        %v2855 = vpack.c.b16 %v2657, %v2651
        %v2856 = vpack.c.b16 %v2658, %v2652
        %v2857 = vpack.c.b16 %v2659, %v2653
        %v2858 = vpack.c.b16 %v2660, %v2654
        %v2859 = vpack.c.b16 %v2667, %v2661
        %v2860 = vpack.c.b16 %v2668, %v2662
        %v2861 = vpack.c.b16 %v2669, %v2663
        %v2862 = vpack.c.b16 %v2670, %v2664
        %v2863 = vpack.c.b16 %v2671, %v2665
        %v2864 = vpack.c.b16 %v2672, %v2666
        %3057 = vmatprep.subr.bf16.mxu0 %v2674
        %3058 = vmatpush1.bf16.msra.mxu0 %v2673
        %3059 = vmatprep.subr.bf16.mxu0 %v2680
        %3060 = vmatpush1.bf16.msra.mxu0 %v2679
        %3061 = vmatprep.subr.bf16.mxu0 %v2686
        %3062 = vmatpush1.bf16.msra.mxu0 %v2685
        %3063 = vmatprep.subr.bf16.mxu0 %v2692
        %3064 = vmatpush1.bf16.msra.mxu0 %v2691
        %3065 = vmatprep.subr.bf16.mxu0 %v2698
        %3066 = vmatpush1.bf16.msra.mxu0 %v2697
        %3067 = vmatprep.subr.bf16.mxu0 %v2704
        %3068 = vmatpush1.bf16.msra.mxu0 %v2703
        %3069 = vmatprep.subr.bf16.mxu0 %v2710
        %3070 = vmatpush1.bf16.msra.mxu0 %v2709
        %3071 = vmatprep.subr.bf16.mxu0 %v2716
        %3072 = vmatpush1.bf16.msra.mxu0 %v2715
        %3073 = vmatprep.subr.bf16.mxu0 %v2722
        %3074 = vmatpush1.bf16.msra.mxu0 %v2721
        %3075 = vmatprep.subr.bf16.mxu0 %v2728
        %3076 = vmatpush1.bf16.msra.mxu0 %v2727
        %3077 = vmatprep.subr.bf16.mxu0 %v2734
        %3078 = vmatpush1.bf16.msra.mxu0 %v2733
        %3079 = vmatprep.subr.bf16.mxu0 %v2740
        %3080 = vmatpush1.bf16.msra.mxu0 %v2739
        %3081 = vmatprep.subr.bf16.mxu0 %v2746
        %3082 = vmatpush1.bf16.msra.mxu0 %v2745
        %3083 = vmatprep.subr.bf16.mxu0 %v2752
        %3084 = vmatpush1.bf16.msra.mxu0 %v2751
        %3085 = vmatprep.subr.bf16.mxu0 %v2758
        %3086 = vmatpush1.bf16.msra.mxu0 %v2757
        %3087 = vmatprep.subr.bf16.mxu0 %v2764
        %3088 = vmatpush1.bf16.msra.mxu0 %v2763
        %3089 = vmatprep.mubr.bf16.mxu0 %v1902
        %3090 = vmatmul.mubr.bf16.gmra.mrb[0].mxu0 %v1901
        %v3091 = vpop.f32.mrb[0].mxu0
        %v3092 = vadd.f32 0.0, %v3091
        %v3093 = vpop.f32.mrb[0].mxu0
        %v3094 = vadd.f32 0.0, %v3093
        %v3095 = vpop.f32.mrb[0].mxu0
        %v3096 = vadd.f32 0.0, %v3095
        %v3097 = vpop.f32.mrb[0].mxu0
        %v3098 = vadd.f32 0.0, %v3097
        %3099 = vdwg.mxu0
        %3100 = vmatprep.subr.bf16.mxu0 %v2770
        %3101 = vmatpush1.bf16.msra.mxu0 %v2769
        %3102 = vmatprep.subr.bf16.mxu0 %v2776
        %3103 = vmatpush1.bf16.msra.mxu0 %v2775
        %3104 = vmatprep.subr.bf16.mxu0 %v2782
        %3105 = vmatpush1.bf16.msra.mxu0 %v2781
        %3106 = vmatprep.subr.bf16.mxu0 %v2788
        %3107 = vmatpush1.bf16.msra.mxu0 %v2787
        %3108 = vmatprep.subr.bf16.mxu0 %v2794
        %3109 = vmatpush1.bf16.msra.mxu0 %v2793
        %3110 = vmatprep.subr.bf16.mxu0 %v2800
        %3111 = vmatpush1.bf16.msra.mxu0 %v2799
        %3112 = vmatprep.subr.bf16.mxu0 %v2806
        %3113 = vmatpush1.bf16.msra.mxu0 %v2805
        %3114 = vmatprep.subr.bf16.mxu0 %v2812
        %3115 = vmatpush1.bf16.msra.mxu0 %v2811
        %3116 = vmatprep.subr.bf16.mxu0 %v2818
        %3117 = vmatpush1.bf16.msra.mxu0 %v2817
        %3118 = vmatprep.subr.bf16.mxu0 %v2824
        %3119 = vmatpush1.bf16.msra.mxu0 %v2823
        %3120 = vmatprep.subr.bf16.mxu0 %v2830
        %3121 = vmatpush1.bf16.msra.mxu0 %v2829
        %3122 = vmatprep.subr.bf16.mxu0 %v2836
        %3123 = vmatpush1.bf16.msra.mxu0 %v2835
        %3124 = vmatprep.subr.bf16.mxu0 %v2842
        %3125 = vmatpush1.bf16.msra.mxu0 %v2841
        %3126 = vmatprep.subr.bf16.mxu0 %v2848
        %3127 = vmatpush1.bf16.msra.mxu0 %v2847
        %3128 = vmatprep.subr.bf16.mxu0 %v2854
        %3129 = vmatpush1.bf16.msra.mxu0 %v2853
        %3130 = vmatprep.subr.bf16.mxu0 %v2860
        %3131 = vmatpush1.bf16.msra.mxu0 %v2859
        %3132 = vmatprep.mubr.bf16.mxu0 %v1904
        %3133 = vmatmul.mubr.bf16.gmra.mrb[0].mxu0 %v1903
        %v3134 = vpop.f32.mrb[0].mxu0
        %v3135 = vadd.f32 %v3092, %v3134
        %v3136 = vpop.f32.mrb[0].mxu0
        %v3137 = vadd.f32 %v3094, %v3136
        %v3138 = vpop.f32.mrb[0].mxu0
        %v3139 = vadd.f32 %v3096, %v3138
        %v3140 = vpop.f32.mrb[0].mxu0
        %v3141 = vadd.f32 %v3098, %v3140
        %3142 = vdwg.mxu0
        %3143 = vmatprep.subr.bf16.mxu0 %v2676
        %3144 = vmatpush1.bf16.msra.mxu0 %v2675
        %3145 = vmatprep.subr.bf16.mxu0 %v2682
        %3146 = vmatpush1.bf16.msra.mxu0 %v2681
        %3147 = vmatprep.subr.bf16.mxu0 %v2688
        %3148 = vmatpush1.bf16.msra.mxu0 %v2687
        %3149 = vmatprep.subr.bf16.mxu0 %v2694
        %3150 = vmatpush1.bf16.msra.mxu0 %v2693
        %3151 = vmatprep.subr.bf16.mxu0 %v2700
        %3152 = vmatpush1.bf16.msra.mxu0 %v2699
        %3153 = vmatprep.subr.bf16.mxu0 %v2706
        %3154 = vmatpush1.bf16.msra.mxu0 %v2705
        %3155 = vmatprep.subr.bf16.mxu0 %v2712
        %3156 = vmatpush1.bf16.msra.mxu0 %v2711
        %3157 = vmatprep.subr.bf16.mxu0 %v2718
        %3158 = vmatpush1.bf16.msra.mxu0 %v2717
        %3159 = vmatprep.subr.bf16.mxu0 %v2724
        %3160 = vmatpush1.bf16.msra.mxu0 %v2723
        %3161 = vmatprep.subr.bf16.mxu0 %v2730
        %3162 = vmatpush1.bf16.msra.mxu0 %v2729
        %3163 = vmatprep.subr.bf16.mxu0 %v2736
        %3164 = vmatpush1.bf16.msra.mxu0 %v2735
        %3165 = vmatprep.subr.bf16.mxu0 %v2742
        %3166 = vmatpush1.bf16.msra.mxu0 %v2741
        %3167 = vmatprep.subr.bf16.mxu0 %v2748
        %3168 = vmatpush1.bf16.msra.mxu0 %v2747
        %3169 = vmatprep.subr.bf16.mxu0 %v2754
        %3170 = vmatpush1.bf16.msra.mxu0 %v2753
        %3171 = vmatprep.subr.bf16.mxu0 %v2760
        %3172 = vmatpush1.bf16.msra.mxu0 %v2759
        %3173 = vmatprep.subr.bf16.mxu0 %v2766
        %3174 = vmatpush1.bf16.msra.mxu0 %v2765
        %3175 = vmatprep.mubr.bf16.mxu0 %v1902
        %3176 = vmatmul.mubr.bf16.gmra.mrb[0].mxu0 %v1901
        %v3177 = vpop.f32.mrb[0].mxu0
        %v3178 = vadd.f32 0.0, %v3177
        %v3179 = vpop.f32.mrb[0].mxu0
        %v3180 = vadd.f32 0.0, %v3179
        %v3181 = vpop.f32.mrb[0].mxu0
        %v3182 = vadd.f32 0.0, %v3181
        %v3183 = vpop.f32.mrb[0].mxu0
        %v3184 = vadd.f32 0.0, %v3183
        %3185 = vdwg.mxu0
        %3186 = vmatprep.subr.bf16.mxu0 %v2772
        %3187 = vmatpush1.bf16.msra.mxu0 %v2771
        %3188 = vmatprep.subr.bf16.mxu0 %v2778
        %3189 = vmatpush1.bf16.msra.mxu0 %v2777
        %3190 = vmatprep.subr.bf16.mxu0 %v2784
        %3191 = vmatpush1.bf16.msra.mxu0 %v2783
        %3192 = vmatprep.subr.bf16.mxu0 %v2790
        %3193 = vmatpush1.bf16.msra.mxu0 %v2789
        %3194 = vmatprep.subr.bf16.mxu0 %v2796
        %3195 = vmatpush1.bf16.msra.mxu0 %v2795
        %3196 = vmatprep.subr.bf16.mxu0 %v2802
        %3197 = vmatpush1.bf16.msra.mxu0 %v2801
        %3198 = vmatprep.subr.bf16.mxu0 %v2808
        %3199 = vmatpush1.bf16.msra.mxu0 %v2807
        %3200 = vmatprep.subr.bf16.mxu0 %v2814
        %3201 = vmatpush1.bf16.msra.mxu0 %v2813
        %3202 = vmatprep.subr.bf16.mxu0 %v2820
        %3203 = vmatpush1.bf16.msra.mxu0 %v2819
        %3204 = vmatprep.subr.bf16.mxu0 %v2826
        %3205 = vmatpush1.bf16.msra.mxu0 %v2825
        %3206 = vmatprep.subr.bf16.mxu0 %v2832
        %3207 = vmatpush1.bf16.msra.mxu0 %v2831
        %3208 = vmatprep.subr.bf16.mxu0 %v2838
        %3209 = vmatpush1.bf16.msra.mxu0 %v2837
        %3210 = vmatprep.subr.bf16.mxu0 %v2844
        %3211 = vmatpush1.bf16.msra.mxu0 %v2843
        %3212 = vmatprep.subr.bf16.mxu0 %v2850
        %3213 = vmatpush1.bf16.msra.mxu0 %v2849
        %3214 = vmatprep.subr.bf16.mxu0 %v2856
        %3215 = vmatpush1.bf16.msra.mxu0 %v2855
        %3216 = vmatprep.subr.bf16.mxu0 %v2862
        %3217 = vmatpush1.bf16.msra.mxu0 %v2861
        %3218 = vmatprep.mubr.bf16.mxu0 %v1904
        %3219 = vmatmul.mubr.bf16.gmra.mrb[0].mxu0 %v1903
        %v3220 = vpop.f32.mrb[0].mxu0
        %v3221 = vadd.f32 %v3178, %v3220
        %v3222 = vpop.f32.mrb[0].mxu0
        %v3223 = vadd.f32 %v3180, %v3222
        %v3224 = vpop.f32.mrb[0].mxu0
        %v3225 = vadd.f32 %v3182, %v3224
        %v3226 = vpop.f32.mrb[0].mxu0
        %v3227 = vadd.f32 %v3184, %v3226
        %3228 = vdwg.mxu0
        %3229 = vmatprep.subr.bf16.mxu0 %v2678
        %3230 = vmatpush1.bf16.msra.mxu0 %v2677
        %3231 = vmatprep.subr.bf16.mxu0 %v2684
        %3232 = vmatpush1.bf16.msra.mxu0 %v2683
        %3233 = vmatprep.subr.bf16.mxu0 %v2690
        %3234 = vmatpush1.bf16.msra.mxu0 %v2689
        %3235 = vmatprep.subr.bf16.mxu0 %v2696
        %3236 = vmatpush1.bf16.msra.mxu0 %v2695
        %3237 = vmatprep.subr.bf16.mxu0 %v2702
        %3238 = vmatpush1.bf16.msra.mxu0 %v2701
        %3239 = vmatprep.subr.bf16.mxu0 %v2708
        %3240 = vmatpush1.bf16.msra.mxu0 %v2707
        %3241 = vmatprep.subr.bf16.mxu0 %v2714
        %3242 = vmatpush1.bf16.msra.mxu0 %v2713
        %3243 = vmatprep.subr.bf16.mxu0 %v2720
        %3244 = vmatpush1.bf16.msra.mxu0 %v2719
        %3245 = vmatprep.subr.bf16.mxu0 %v2726
        %3246 = vmatpush1.bf16.msra.mxu0 %v2725
        %3247 = vmatprep.subr.bf16.mxu0 %v2732
        %3248 = vmatpush1.bf16.msra.mxu0 %v2731
        %3249 = vmatprep.subr.bf16.mxu0 %v2738
        %3250 = vmatpush1.bf16.msra.mxu0 %v2737
        %3251 = vmatprep.subr.bf16.mxu0 %v2744
        %3252 = vmatpush1.bf16.msra.mxu0 %v2743
        %3253 = vmatprep.subr.bf16.mxu0 %v2750
        %3254 = vmatpush1.bf16.msra.mxu0 %v2749
        %3255 = vmatprep.subr.bf16.mxu0 %v2756
        %3256 = vmatpush1.bf16.msra.mxu0 %v2755
        %3257 = vmatprep.subr.bf16.mxu0 %v2762
        %3258 = vmatpush1.bf16.msra.mxu0 %v2761
        %3259 = vmatprep.subr.bf16.mxu0 %v2768
        %3260 = vmatpush1.bf16.msra.mxu0 %v2767
        %3261 = vmatprep.mubr.bf16.mxu0 %v1902
        %3262 = vmatmul.mubr.bf16.gmra.mrb[0].mxu0 %v1901
        %v3263 = vpop.f32.mrb[0].mxu0
        %v3264 = vadd.f32 0.0, %v3263
        %v3265 = vpop.f32.mrb[0].mxu0
        %v3266 = vadd.f32 0.0, %v3265
        %v3267 = vpop.f32.mrb[0].mxu0
        %v3268 = vadd.f32 0.0, %v3267
        %v3269 = vpop.f32.mrb[0].mxu0
        %v3270 = vadd.f32 0.0, %v3269
        %3271 = vdwg.mxu0
        %3272 = vmatprep.subr.bf16.mxu0 %v2774
        %3273 = vmatpush1.bf16.msra.mxu0 %v2773
        %3274 = vmatprep.subr.bf16.mxu0 %v2780
        %3275 = vmatpush1.bf16.msra.mxu0 %v2779
        %3276 = vmatprep.subr.bf16.mxu0 %v2786
        %3277 = vmatpush1.bf16.msra.mxu0 %v2785
        %3278 = vmatprep.subr.bf16.mxu0 %v2792
        %3279 = vmatpush1.bf16.msra.mxu0 %v2791
        %3280 = vmatprep.subr.bf16.mxu0 %v2798
        %3281 = vmatpush1.bf16.msra.mxu0 %v2797
        %3282 = vmatprep.subr.bf16.mxu0 %v2804
        %3283 = vmatpush1.bf16.msra.mxu0 %v2803
        %3284 = vmatprep.subr.bf16.mxu0 %v2810
        %3285 = vmatpush1.bf16.msra.mxu0 %v2809
        %3286 = vmatprep.subr.bf16.mxu0 %v2816
        %3287 = vmatpush1.bf16.msra.mxu0 %v2815
        %3288 = vmatprep.subr.bf16.mxu0 %v2822
        %3289 = vmatpush1.bf16.msra.mxu0 %v2821
        %3290 = vmatprep.subr.bf16.mxu0 %v2828
        %3291 = vmatpush1.bf16.msra.mxu0 %v2827
        %3292 = vmatprep.subr.bf16.mxu0 %v2834
        %3293 = vmatpush1.bf16.msra.mxu0 %v2833
        %3294 = vmatprep.subr.bf16.mxu0 %v2840
        %3295 = vmatpush1.bf16.msra.mxu0 %v2839
        %3296 = vmatprep.subr.bf16.mxu0 %v2846
        %3297 = vmatpush1.bf16.msra.mxu0 %v2845
        %3298 = vmatprep.subr.bf16.mxu0 %v2852
        %3299 = vmatpush1.bf16.msra.mxu0 %v2851
        %3300 = vmatprep.subr.bf16.mxu0 %v2858
        %3301 = vmatpush1.bf16.msra.mxu0 %v2857
        %3302 = vmatprep.subr.bf16.mxu0 %v2864
        %3303 = vmatpush1.bf16.msra.mxu0 %v2863
        %3304 = vmatprep.mubr.bf16.mxu0 %v1904
        %3305 = vmatmul.mubr.bf16.gmra.mrb[0].mxu0 %v1903
        %v3306 = vpop.f32.mrb[0].mxu0
        %v3307 = vadd.f32 %v3264, %v3306
        %v3308 = vpop.f32.mrb[0].mxu0
        %v3309 = vadd.f32 %v3266, %v3308
        %v3310 = vpop.f32.mrb[0].mxu0
        %v3311 = vadd.f32 %v3268, %v3310
        %v3312 = vpop.f32.mrb[0].mxu0
        %v3313 = vadd.f32 %v3270, %v3312
        %3314 = vdwg.mxu0
        %v3315 = vadd.f32 %v1889, %v3135
        %v3316 = vadd.f32 %v1890, %v3137
        %v3317 = vadd.f32 %v1891, %v3221
        %v3318 = vadd.f32 %v1892, %v3223
        %v3319 = vadd.f32 %v1893, %v3307
        %v3320 = vadd.f32 %v1894, %v3309
        %v3321 = vadd.f32 %v1895, %v3139
        %v3322 = vadd.f32 %v1896, %v3141
        %v3323 = vadd.f32 %v1897, %v3225
        %v3324 = vadd.f32 %v1898, %v3227
        %v3325 = vadd.f32 %v1899, %v3311
        %v3326 = vadd.f32 %v1900, %v3313
        %3327 = vst [vmem:[#allocation2] sm:$0xff] %v3315
        %3328 = vst [vmem:[#allocation2 + $0x8] sm:$0xff] %v3316
        %3329 = vst [vmem:[#allocation2 + $0x10] sm:$0xff] %v3317
        %3330 = vst [vmem:[#allocation2 + $0x18] sm:$0xff] %v3318
        %3331 = vst [vmem:[#allocation2 + $0x20] sm:$0xff] %v3319
        %3332 = vst [vmem:[#allocation2 + $0x28] sm:$0xff] %v3320
        %3333 = vst [vmem:[#allocation2 + $0x30] sm:$0xff] %v3321
        %3334 = vst [vmem:[#allocation2 + $0x38] sm:$0xff] %v3322
        %3335 = vst [vmem:[#allocation2 + $0x40] sm:$0xff] %v3323
        %3336 = vst [vmem:[#allocation2 + $0x48] sm:$0xff] %v3324
        %3337 = vst [vmem:[#allocation2 + $0x50] sm:$0xff] %v3325
        %3338 = vst [vmem:[#allocation2 + $0x58] sm:$0xff] %v3326
        %p3339 = scmp.eq.s32.totalorder %s29, 5
        // Predicated region
        $region65: #{tpu_custom_call.1} parent=39 // pred_check
          %p3340 = pneg %p3339
        $region66: #{tpu_custom_call.1} parent=39 // pred_check_branch
          %3342 = sbr.rel (%p3340) target = $region68
        $region67: #{tpu_custom_call.1} parent=39 // pred_region
          %v3343 = vld [vmem:[#allocation2] sm:$0xff]
          %v3344 = vld [vmem:[#allocation2 + $0x8] sm:$0xff]
          %v3345 = vld [vmem:[#allocation2 + $0x10] sm:$0xff]
          %v3346 = vld [vmem:[#allocation2 + $0x18] sm:$0xff]
          %v3347 = vld [vmem:[#allocation2 + $0x20] sm:$0xff]
          %v3348 = vld [vmem:[#allocation2 + $0x28] sm:$0xff]
          %v3349 = vld [vmem:[#allocation2 + $0x30] sm:$0xff]
          %v3350 = vld [vmem:[#allocation2 + $0x38] sm:$0xff]
          %v3351 = vld [vmem:[#allocation2 + $0x40] sm:$0xff]
          %v3352 = vld [vmem:[#allocation2 + $0x48] sm:$0xff]
          %v3353 = vld [vmem:[#allocation2 + $0x50] sm:$0xff]
          %v3354 = vld [vmem:[#allocation2 + $0x58] sm:$0xff]
          %v3355 = vld [vmem:[#allocation11] sm:$0x3f]
          %v3357 = vlaneseq
          %v3358 = vshrl.u32 %v3357, 7
          %v3359 = vsub.s32 0, %v3358
          %v3360 = vrot.slane %v3355, %v3359
          %v3361 = vlaneseq
          %v3362 = vshrl.u32 %v3361, 7
          %v3363 = vsub.s32 1, %v3362
          %v3364 = vrot.slane %v3355, %v3363
          %v3365 = vlaneseq
          %v3366 = vshrl.u32 %v3365, 7
          %v3367 = vsub.s32 2, %v3366
          %v3368 = vrot.slane %v3355, %v3367
          %v3369 = vlaneseq
          %v3370 = vshrl.u32 %v3369, 7
          %v3371 = vsub.s32 3, %v3370
          %v3372 = vrot.slane %v3355, %v3371
          %v3373 = vlaneseq
          %v3374 = vshrl.u32 %v3373, 7
          %v3375 = vsub.s32 4, %v3374
          %v3376 = vrot.slane %v3355, %v3375
          %v3377 = vlaneseq
          %v3378 = vshrl.u32 %v3377, 7
          %v3379 = vsub.s32 5, %v3378
          %v3380 = vrot.slane %v3355, %v3379
          %v3387 = vadd.f32 %v3343, %v3360
          %v3388 = vadd.f32 %v3344, %v3364
          %v3389 = vadd.f32 %v3345, %v3368
          %v3390 = vadd.f32 %v3346, %v3372
          %v3391 = vadd.f32 %v3347, %v3376
          %v3392 = vadd.f32 %v3348, %v3380
          %v3393 = vadd.f32 %v3349, %v3360
          %v3394 = vadd.f32 %v3350, %v3364
          %v3395 = vadd.f32 %v3351, %v3368
          %v3396 = vadd.f32 %v3352, %v3372
          %v3397 = vadd.f32 %v3353, %v3376
          %v3398 = vadd.f32 %v3354, %v3380
          %3399 = vst [vmem:[#allocation12] sm:$0xff] %v3387
          %3400 = vst [vmem:[#allocation12 + $0x8] sm:$0xff] %v3388
          %3401 = vst [vmem:[#allocation12 + $0x10] sm:$0xff] %v3389
          %3402 = vst [vmem:[#allocation12 + $0x18] sm:$0xff] %v3390
          %3403 = vst [vmem:[#allocation12 + $0x20] sm:$0xff] %v3391
          %3404 = vst [vmem:[#allocation12 + $0x28] sm:$0xff] %v3392
          %3405 = vst [vmem:[#allocation12 + $0x30] sm:$0xff] %v3393
          %3406 = vst [vmem:[#allocation12 + $0x38] sm:$0xff] %v3394
          %3407 = vst [vmem:[#allocation12 + $0x40] sm:$0xff] %v3395
          %3408 = vst [vmem:[#allocation12 + $0x48] sm:$0xff] %v3396
          %3409 = vst [vmem:[#allocation12 + $0x50] sm:$0xff] %v3397
          %3410 = vst [vmem:[#allocation12 + $0x58] sm:$0xff] %v3398
        $region68: #{tpu_custom_call.1} parent=39 // pred_fallthru
          _
        // Predicated region
        $region69: #{tpu_custom_call.1} parent=39 // pred_check
          %p3411 = pneg %p179
        $region70: #{tpu_custom_call.1} parent=39 // pred_check_branch
          %3413 = sbr.rel (%p3411) target = $region72
        $region71: #{tpu_custom_call.1} parent=39 // pred_region
          %s3414 = smul.u32 2, %s28
          %s3416 = ssub.s32 1536, 1536
          %3417 = vsyncadd [#allocation5], %s3416
          %s3418 = smul.addr %s3414, 6
          %s3419 = smul.addr %s3418, 128
          %s3420 = scalar_lea.hbm %s5, %s3419
          %s3421 = sshll.u32 [#allocation12], 4
          %s3422 = int_to_ptr.vmem [resolvable:$true] %s3421
          %3427 = dma.vmem_to_hbm [thread:$0]  %s3422, 1536, %s3420, [#allocation5], 768, 768, 48
        $region72: #{tpu_custom_call.1} parent=39 // pred_fallthru
          _
        // Predicated region
        $region73: #{tpu_custom_call.1} parent=39 // pred_check
          %p3428 = pneg %p179
        $region74: #{tpu_custom_call.1} parent=39 // pred_check_branch
          %3430 = sbr.rel (%p3428) target = $region76
        $region75: #{tpu_custom_call.1} parent=39 // pred_region
          %3431 = dma.done [#allocation5], 1536
        $region76: #{tpu_custom_call.1} parent=39 // pred_fallthru
          _
      $region40: #{tpu_custom_call.1} parent=5 // pred_fallthru
        _
      %p3432 = scmp.le.s32.totalorder 2, %s19
      // Predicated region
      $region77: #{tpu_custom_call.1} parent=5 // pred_check
        %p3433 = pneg %p3432
      $region78: #{tpu_custom_call.1} parent=5 // pred_check_branch
        %3435 = sbr.rel (%p3433) target = $region80
      $region79: #{tpu_custom_call.1} parent=5 // pred_region
        %s3436 = ssub.s32 %s19, 2
      $region80: #{tpu_custom_call.1} parent=5 // pred_fallthru
        _
    $region6: #{tpu_custom_call.1} parent=1 // loop_footer
      %s23 = sadd.s32 1, %s19
    $region7: #{tpu_custom_call.1} parent=1 // loop_footer_branch
      %18 = sbr.rel target = $region3
    $region8: #{tpu_custom_call.1} parent=1 // loop_exit
      _
    %3437 = vsyncpa [#allocation4], 1
    %s3438 = scalar_lea.sflag [#allocation4], 1
    %3439 = vsyncpa %s3438, 1
    %3440 = vsyncpa [#allocation7], 1
    %s3441 = scalar_lea.sflag [#allocation7], 1
    %3442 = vsyncpa %s3441, 1
    %3443 = vsyncpa [#allocation10], 1
    %s3444 = scalar_lea.sflag [#allocation10], 1
    %3445 = vsyncpa %s3444, 1
    %3446 = vsyncpa [#allocation5], 1
    %s3447 = scalar_lea.sflag [#allocation5], 1
    %3448 = vsyncpa %s3447, 1

</llo_original>
